<compile_context>
chip_gen: v7x
topology: tpu7x:2x2x1
jax: 0.10.0
libtpu: 0.0.40
codegen_flags: <defaults>
</compile_context>

<pallas_src>
import jax
import jax.numpy as jnp
from jax import lax
from jax.experimental import pallas as pl
from jax.experimental.pallas import tpu as pltpu


# -----------------------------------------------------------------------------
# Pallas kernel: fused upsample + concat + DoubleConv for one batch element
# -----------------------------------------------------------------------------
def _up_double_conv_kernel(x2_ref, x1_ref, uh_ref, dmat_ref, umat_ref,
                           b1a_ref, b1b_ref, bias1_ref,
                           b2_ref, bias2_ref, out_ref):
    # x2_ref   : (1, H2, W2*C2)   skip connection, row layout
    # x1_ref   : (1, H1, W1*C1)   low-res input (pre-upsample), row layout
    # uh_ref   : (H2, H1)         bilinear H-upsample (+ diffY pad) matrix
    # dmat_ref : (H2, H2)         row shift-down matrix  (D[h, h-1] = 1)
    # umat_ref : (H2, H2)         row shift-up matrix    (U[h, h+1] = 1)
    # b1a_ref  : (3, W2*C2, W2*Cm)  banded conv1 weights (x2 channel block, BN1 scale folded)
    # b1b_ref  : (3, W1*C1, W2*Cm)  banded conv1 weights (x1 block) with the bilinear
    #                               W-upsample (+ diffX pad) folded in
    # bias1_ref: (1, W2*Cm)       conv1 bias + BN1 shift, tiled per pixel
    # b2_ref   : (3, W2*Cm, W2*Cout)  banded conv2 weights (BN2 scale folded)
    # bias2_ref: (1, W2*Cout)     conv2 bias + BN2 shift, tiled per pixel
    # out_ref  : (1, H2, W2*Cout)
    f32 = jnp.float32
    x2 = x2_ref[0]                       # (H2, W2*C2)
    d = dmat_ref[...]
    u = umat_ref[...]

    # bilinear 2x upsample of x1 along H (align_corners=True) as one matmul;
    # the W-direction interpolation is already folded into b1b.
    m1 = jnp.dot(uh_ref[...], x1_ref[0], preferred_element_type=f32)   # (H2, W1*C1)

    # ---- conv1 (3x3, pad=1) + BN1 + ReLU ------------------------------------
    # out1[h] = row[h-1] @ B1[0] + row[h] @ B1[1] + row[h+1] @ B1[2]
    #         = D @ s0 + s1 + U @ s2         (zero rows at the borders via D / U)
    def tap1(dy):
        return (jnp.dot(x2, b1a_ref[dy], preferred_element_type=f32) +
                jnp.dot(m1, b1b_ref[dy], preferred_element_type=f32))

    s0, s1, s2 = tap1(0), tap1(1), tap1(2)
    acc1 = (jnp.dot(d, s0, preferred_element_type=f32) + s1 +
            jnp.dot(u, s2, preferred_element_type=f32))
    h1 = jnp.maximum(acc1 + bias1_ref[...], 0.0)                        # (H2, W2*Cm)

    # ---- conv2 (3x3, pad=1) + BN2 + ReLU ------------------------------------
    p0 = jnp.dot(h1, b2_ref[0], preferred_element_type=f32)
    p1 = jnp.dot(h1, b2_ref[1], preferred_element_type=f32)
    p2 = jnp.dot(h1, b2_ref[2], preferred_element_type=f32)
    acc2 = (jnp.dot(d, p0, preferred_element_type=f32) + p1 +
            jnp.dot(u, p2, preferred_element_type=f32))
    out = jnp.maximum(acc2 + bias2_ref[...], 0.0)                       # (H2, W2*Cout)
    out_ref[0] = out.astype(out_ref.dtype)


# -----------------------------------------------------------------------------
# Wrapper-side weight preparation (all done once on tiny weight tensors)
# -----------------------------------------------------------------------------
def _upsample_matrix(n_in, n_out):
    """(n_out, n_in) bilinear interpolation matrix, align_corners=True."""
    if n_in == 1:
        return jnp.ones((n_out, 1), jnp.float32)
    src = jnp.arange(n_out, dtype=jnp.float32) * (n_in - 1) / (n_out - 1)
    i0 = jnp.clip(jnp.floor(src).astype(jnp.int32), 0, n_in - 2)
    frac = src - i0.astype(jnp.float32)
    rows = jnp.arange(n_out)
    m = jnp.zeros((n_out, n_in), jnp.float32)
    m = m.at[rows, i0].add(1.0 - frac)
    m = m.at[rows, i0 + 1].add(frac)
    return m


def _banded_conv_matrix(w_hwio, width):
    """Block-banded matrix of a 3x3 'same' conv along W in (H, W*C) row layout.

    w_hwio: (3, 3, Ci, Co).  Returns B of shape (3, width*Ci, width*Co) with
    B[dy][(w+dx-1)*Ci + ci, w*Co + co] = w_hwio[dy, dx, ci, co]  (out-of-range -> 0).
    """
    mats = []
    for dy in range(3):
        m = None
        for dx in range(3):
            shift = jnp.eye(width, k=1 - dx, dtype=jnp.float32)   # ones where win = w+dx-1
            term = jnp.kron(shift, w_hwio[dy, dx])
            m = term if m is None else m + term
        mats.append(m)
    return jnp.stack(mats)


def prepare_up_params(params, x1_shape, x2_shape):
    """Fold BN scales into the conv weights and build all kernel-side operands."""
    w1, s1, b1, w2, s2, b2 = params
    _, c1, h1, w1sp = x1_shape          # NCHW
    _, c2, h2, w2sp = x2_shape
    cm = w1.shape[3]
    cout = w2.shape[3]
    assert w1.shape[2] == c1 + c2

    # fold the BatchNorm scale into the conv weights (conv is linear)
    w1f = w1 * s1.reshape(1, 1, 1, cm)
    w2f = w2 * s2.reshape(1, 1, 1, cout)

    # bilinear 2x upsample (+ F.pad) matrices for the x1 branch
    h1u, w1u = 2 * h1, 2 * w1sp
    diff_y, diff_x = h2 - h1u, w2sp - w1u
    uh = jnp.zeros((h2, h1), jnp.float32)
    uh = uh.at[diff_y // 2: diff_y // 2 + h1u, :].set(_upsample_matrix(h1, h1u))
    uw = jnp.zeros((w2sp, w1sp), jnp.float32)
    uw = uw.at[diff_x // 2: diff_x // 2 + w1u, :].set(_upsample_matrix(w1sp, w1u))
    # expansion of an x1 row (W1*C1 lanes) to an upsampled/padded row (W2*C1 lanes)
    uwx = jnp.kron(uw.T, jnp.eye(c1, dtype=jnp.float32))          # (W1*C1, W2*C1)

    # banded conv1 weights; channel split follows torch.cat([x2, x1], dim=1)
    b1a = _banded_conv_matrix(w1f[:, :, :c2, :], w2sp)            # (3, W2*C2, W2*Cm)
    b1b_full = _banded_conv_matrix(w1f[:, :, c2:, :], w2sp)       # (3, W2*C1, W2*Cm)
    b1b = jnp.einsum('ij,djk->dik', uwx, b1b_full)                # fold W-upsample in
    b2m = _banded_conv_matrix(w2f, w2sp)                          # (3, W2*Cm, W2*Cout)

    bias1 = jnp.tile(b1, w2sp).reshape(1, w2sp * cm)
    bias2 = jnp.tile(b2, w2sp).reshape(1, w2sp * cout)

    dmat = jnp.eye(h2, k=-1, dtype=jnp.float32)    # out row h <- row h-1
    umat = jnp.eye(h2, k=+1, dtype=jnp.float32)    # out row h <- row h+1
    return (uh, dmat, umat, b1a, b1b, bias1, b2m, bias2)


# -----------------------------------------------------------------------------
# Full Up.forward (NCHW in / NCHW out, PyTorch convention)
# -----------------------------------------------------------------------------
def up_forward(x1_nchw, x2_nchw, params):
    B, C1, H1, W1 = x1_nchw.shape
    _, C2, H2, W2 = x2_nchw.shape
    cout = params[3].shape[3]
    uh, dmat, umat, b1a, b1b, bias1, b2m, bias2 = prepare_up_params(
        params, x1_nchw.shape, x2_nchw.shape)
    cm = b1a.shape[2] // W2

    # lane-dense row layout: (B, H, W*C)
    x1_rows = jnp.transpose(x1_nchw, (0, 2, 3, 1)).reshape(B, H1, W1 * C1)
    x2_rows = jnp.transpose(x2_nchw, (0, 2, 3, 1)).reshape(B, H2, W2 * C2)

    out_rows = pl.pallas_call(
        _up_double_conv_kernel,
        out_shape=jax.ShapeDtypeStruct((B, H2, W2 * cout), jnp.float32),
        grid_spec=pltpu.PrefetchScalarGridSpec(
            num_scalar_prefetch=0,
            grid=(B,),
            in_specs=[
                pl.BlockSpec((1, H2, W2 * C2), lambda b: (b, 0, 0)),
                pl.BlockSpec((1, H1, W1 * C1), lambda b: (b, 0, 0)),
                pl.BlockSpec((H2, H1), lambda b: (0, 0)),
                pl.BlockSpec((H2, H2), lambda b: (0, 0)),
                pl.BlockSpec((H2, H2), lambda b: (0, 0)),
                pl.BlockSpec((3, W2 * C2, W2 * cm), lambda b: (0, 0, 0)),
                pl.BlockSpec((3, W1 * C1, W2 * cm), lambda b: (0, 0, 0)),
                pl.BlockSpec((1, W2 * cm), lambda b: (0, 0)),
                pl.BlockSpec((3, W2 * cm, W2 * cout), lambda b: (0, 0, 0)),
                pl.BlockSpec((1, W2 * cout), lambda b: (0, 0)),
            ],
            out_specs=pl.BlockSpec((1, H2, W2 * cout), lambda b: (b, 0, 0)),
        ),
        compiler_params=pltpu.CompilerParams(
            dimension_semantics=("parallel",),
            # raised above the v5e default (16 MiB); compute from block sizes for
            # larger feature maps.
            vmem_limit_bytes=32 * 1024 * 1024),
    )(x2_rows, x1_rows, uh, dmat, umat, b1a, b1b, bias1, b2m, bias2)

    out = out_rows.reshape(B, H2, W2, cout)
    return jnp.transpose(out, (0, 3, 1, 2))      # back to NCHW


# -----------------------------------------------------------------------------
# Deterministic parameters (BatchNorm folded, eval-mode semantics)
# -----------------------------------------------------------------------------
def make_params(in_channels, out_channels, key):
    mid = in_channels // 2
    eps = 1e-5
    ks = jax.random.split(key, 12)

    w1 = 0.1 * jax.random.normal(ks[0], (3, 3, in_channels, mid), jnp.float32)
    cb1 = 0.05 * jax.random.normal(ks[1], (mid,), jnp.float32)
    g1 = 1.0 + 0.1 * jax.random.normal(ks[2], (mid,), jnp.float32)
    beta1 = 0.05 * jax.random.normal(ks[3], (mid,), jnp.float32)
    rm1 = 0.02 * jax.random.normal(ks[4], (mid,), jnp.float32)
    rv1 = jnp.abs(1.0 + 0.1 * jax.random.normal(ks[5], (mid,), jnp.float32))

    w2 = 0.1 * jax.random.normal(ks[6], (3, 3, mid, out_channels), jnp.float32)
    cb2 = 0.05 * jax.random.normal(ks[7], (out_channels,), jnp.float32)
    g2 = 1.0 + 0.1 * jax.random.normal(ks[8], (out_channels,), jnp.float32)
    beta2 = 0.05 * jax.random.normal(ks[9], (out_channels,), jnp.float32)
    rm2 = 0.02 * jax.random.normal(ks[10], (out_channels,), jnp.float32)
    rv2 = jnp.abs(1.0 + 0.1 * jax.random.normal(ks[11], (out_channels,), jnp.float32))

    # fold BN (inference / running-stats) into per-channel scale & bias:
    #   y = (conv_nobias(x) + cb - mean) * gamma/sqrt(var+eps) + beta
    s1 = g1 / jnp.sqrt(rv1 + eps)
    b1 = (cb1 - rm1) * s1 + beta1
    s2 = g2 / jnp.sqrt(rv2 + eps)
    b2 = (cb2 - rm2) * s2 + beta2
    # TODO(synk): training-mode BatchNorm (batch statistics) is not implemented;
    # this reproduces eval-mode semantics with deterministic running stats.
    return (w1, s1, b1, w2, s2, b2)


# -----------------------------------------------------------------------------
# Pure-JAX reference (for correctness check)
# -----------------------------------------------------------------------------
def bilinear_upsample_x2_align_corners(x):
    B, H, W, C = x.shape
    Ho, Wo = 2 * H, 2 * W

    def coords(n_in, n_out):
        if n_in == 1:
            z = jnp.zeros((n_out,), jnp.int32)
            return z, z, jnp.zeros((n_out,), jnp.float32)
        src = jnp.arange(n_out, dtype=jnp.float32) * (n_in - 1) / (n_out - 1)
        i0 = jnp.clip(jnp.floor(src).astype(jnp.int32), 0, n_in - 2)
        frac = src - i0.astype(jnp.float32)
        return i0, i0 + 1, frac

    y0, y1, fy = coords(H, Ho)
    x0, x1_, fx = coords(W, Wo)
    top = x[:, y0, :, :]
    bot = x[:, y1, :, :]
    rows = top * (1.0 - fy)[None, :, None, None] + bot * fy[None, :, None, None]
    left = rows[:, :, x0, :]
    right = rows[:, :, x1_, :]
    return left * (1.0 - fx)[None, None, :, None] + right * fx[None, None, :, None]


def ref_up_forward(x1_nchw, x2_nchw, params):
    w1, s1, b1, w2, s2, b2 = params
    x1 = jnp.transpose(x1_nchw, (0, 2, 3, 1))
    x2 = jnp.transpose(x2_nchw, (0, 2, 3, 1))
    x1 = bilinear_upsample_x2_align_corners(x1)
    diffY = x2.shape[1] - x1.shape[1]
    diffX = x2.shape[2] - x1.shape[2]
    x1 = jnp.pad(x1, ((0, 0),
                      (diffY // 2, diffY - diffY // 2),
                      (diffX // 2, diffX - diffX // 2),
                      (0, 0)))
    x = jnp.concatenate([x2, x1], axis=-1)

    def conv(v, w):
        return lax.conv_general_dilated(
            v, w, window_strides=(1, 1), padding="SAME",
            dimension_numbers=("NHWC", "HWIO", "NHWC"))

    h = jnp.maximum(conv(x, w1) * s1 + b1, 0.0)
    o = jnp.maximum(conv(h, w2) * s2 + b2, 0.0)
    return jnp.transpose(o, (0, 3, 1, 2))


if __name__ == "__main__":
    # Up(in_channels=8, out_channels=8, bilinear=True)
    # x1: (B, in_channels//2, H1, W1), x2: (B, in_channels//2, 2*H1, 2*W1)  [NCHW]
    in_channels, out_channels = 8, 8
    B, H1, W1 = 2, 16, 16

    key = jax.random.PRNGKey(0)
    k1, k2, kp = jax.random.split(key, 3)
    x1 = jax.random.normal(k1, (B, in_channels // 2, H1, W1), jnp.float32)
    x2 = jax.random.normal(k2, (B, in_channels // 2, 2 * H1, 2 * W1), jnp.float32)
    params = make_params(in_channels, out_channels, kp)

    out = jax.block_until_ready(up_forward(x1, x2, params))
    assert out.shape == (B, out_channels, 2 * H1, 2 * W1), out.shape

    ref = jax.block_until_ready(ref_up_forward(x1, x2, params))
    err = float(jnp.max(jnp.abs(out - ref)))
    assert err < 1e-3, f"max abs error {err}"

    print("KERNEL_OK")
</pallas_src>

<mosaic_0001>
module attributes {stable_mosaic.version = 11 : i64} {
  func.func @_up_double_conv_kernel(%arg0: i32, %arg1: memref<1x32x128xf32, #tpu.memory_space<vmem>>, %arg2: memref<1x16x64xf32, #tpu.memory_space<vmem>>, %arg3: memref<32x16xf32, #tpu.memory_space<vmem>>, %arg4: memref<32x32xf32, #tpu.memory_space<vmem>>, %arg5: memref<32x32xf32, #tpu.memory_space<vmem>>, %arg6: memref<3x128x128xf32, #tpu.memory_space<vmem>>, %arg7: memref<3x64x128xf32, #tpu.memory_space<vmem>>, %arg8: memref<1x128xf32, #tpu.memory_space<vmem>>, %arg9: memref<3x128x256xf32, #tpu.memory_space<vmem>>, %arg10: memref<1x256xf32, #tpu.memory_space<vmem>>, %arg11: memref<1x32x256xf32, #tpu.memory_space<vmem>>) attributes {dimension_semantics = [#tpu.dimension_semantics<parallel>], iteration_bounds = array<i64: 2>, scalar_prefetch = 0 : i64, scratch_operands = 0 : i64, tpu.core_type = #tpu.core_type<tc>, window_params = [{transform_indices = @transform_0, window_bounds = array<i64: 1, 32, 128>}, {transform_indices = @transform_1, window_bounds = array<i64: 1, 16, 64>}, {pipeline_mode = #tpu.pipeline_mode<synchronous>, transform_indices = @transform_2, window_bounds = array<i64: 32, 16>}, {pipeline_mode = #tpu.pipeline_mode<synchronous>, transform_indices = @transform_3, window_bounds = array<i64: 32, 32>}, {pipeline_mode = #tpu.pipeline_mode<synchronous>, transform_indices = @transform_4, window_bounds = array<i64: 32, 32>}, {pipeline_mode = #tpu.pipeline_mode<synchronous>, transform_indices = @transform_5, window_bounds = array<i64: 3, 128, 128>}, {pipeline_mode = #tpu.pipeline_mode<synchronous>, transform_indices = @transform_6, window_bounds = array<i64: 3, 64, 128>}, {pipeline_mode = #tpu.pipeline_mode<synchronous>, transform_indices = @transform_7, window_bounds = array<i64: 1, 128>}, {pipeline_mode = #tpu.pipeline_mode<synchronous>, transform_indices = @transform_8, window_bounds = array<i64: 3, 128, 256>}, {pipeline_mode = #tpu.pipeline_mode<synchronous>, transform_indices = @transform_9, window_bounds = array<i64: 1, 256>}, {transform_indices = @transform_10, window_bounds = array<i64: 1, 32, 256>}]} {
    %c0 = arith.constant 0 : index
    %c0_0 = arith.constant 0 : index
    %c0_1 = arith.constant 0 : index
    %0 = vector.load %arg1[%c0, %c0_0, %c0_1] : memref<1x32x128xf32, #tpu.memory_space<vmem>>, vector<1x32x128xf32>
    %1 = vector.shape_cast %0 : vector<1x32x128xf32> to vector<32x128xf32>
    %c0_2 = arith.constant 0 : index
    %c0_3 = arith.constant 0 : index
    %2 = vector.load %arg4[%c0_2, %c0_3] : memref<32x32xf32, #tpu.memory_space<vmem>>, vector<32x32xf32>
    %c0_4 = arith.constant 0 : index
    %c0_5 = arith.constant 0 : index
    %3 = vector.load %arg5[%c0_4, %c0_5] : memref<32x32xf32, #tpu.memory_space<vmem>>, vector<32x32xf32>
    %c0_6 = arith.constant 0 : index
    %c0_7 = arith.constant 0 : index
    %4 = vector.load %arg3[%c0_6, %c0_7] : memref<32x16xf32, #tpu.memory_space<vmem>>, vector<32x16xf32>
    %c0_8 = arith.constant 0 : index
    %c0_9 = arith.constant 0 : index
    %c0_10 = arith.constant 0 : index
    %5 = vector.load %arg2[%c0_8, %c0_9, %c0_10] : memref<1x16x64xf32, #tpu.memory_space<vmem>>, vector<1x16x64xf32>
    %6 = vector.shape_cast %5 : vector<1x16x64xf32> to vector<16x64xf32>
    %cst = arith.constant dense<0.000000e+00> : vector<32x64xf32>
    %7 = tpu.matmul %4, %6, %cst {dimension_numbers = #tpu.dot_dimension_numbers<[1], [0], [0], [1], [0, 0, 1, 1], [], []>} : vector<32x16xf32>, vector<16x64xf32>, vector<32x64xf32> -> vector<32x64xf32>
    %c0_11 = arith.constant 0 : index
    %c0_12 = arith.constant 0 : index
    %c0_13 = arith.constant 0 : index
    %8 = vector.load %arg6[%c0_11, %c0_12, %c0_13] : memref<3x128x128xf32, #tpu.memory_space<vmem>>, vector<1x128x128xf32>
    %9 = vector.shape_cast %8 : vector<1x128x128xf32> to vector<128x128xf32>
    %cst_14 = arith.constant dense<0.000000e+00> : vector<32x128xf32>
    %10 = tpu.matmul %1, %9, %cst_14 {dimension_numbers = #tpu.dot_dimension_numbers<[1], [0], [0], [1], [0, 0, 1, 1], [], []>} : vector<32x128xf32>, vector<128x128xf32>, vector<32x128xf32> -> vector<32x128xf32>
    %c0_15 = arith.constant 0 : index
    %c0_16 = arith.constant 0 : index
    %c0_17 = arith.constant 0 : index
    %11 = vector.load %arg7[%c0_15, %c0_16, %c0_17] : memref<3x64x128xf32, #tpu.memory_space<vmem>>, vector<1x64x128xf32>
    %12 = vector.shape_cast %11 : vector<1x64x128xf32> to vector<64x128xf32>
    %cst_18 = arith.constant dense<0.000000e+00> : vector<32x128xf32>
    %13 = tpu.matmul %7, %12, %cst_18 {dimension_numbers = #tpu.dot_dimension_numbers<[1], [0], [0], [1], [0, 0, 1, 1], [], []>} : vector<32x64xf32>, vector<64x128xf32>, vector<32x128xf32> -> vector<32x128xf32>
    %14 = arith.addf %10, %13 : vector<32x128xf32>
    %c1 = arith.constant 1 : index
    %c0_19 = arith.constant 0 : index
    %c0_20 = arith.constant 0 : index
    %15 = vector.load %arg6[%c1, %c0_19, %c0_20] : memref<3x128x128xf32, #tpu.memory_space<vmem>>, vector<1x128x128xf32>
    %16 = vector.shape_cast %15 : vector<1x128x128xf32> to vector<128x128xf32>
    %cst_21 = arith.constant dense<0.000000e+00> : vector<32x128xf32>
    %17 = tpu.matmul %1, %16, %cst_21 {dimension_numbers = #tpu.dot_dimension_numbers<[1], [0], [0], [1], [0, 0, 1, 1], [], []>} : vector<32x128xf32>, vector<128x128xf32>, vector<32x128xf32> -> vector<32x128xf32>
    %c1_22 = arith.constant 1 : index
    %c0_23 = arith.constant 0 : index
    %c0_24 = arith.constant 0 : index
    %18 = vector.load %arg7[%c1_22, %c0_23, %c0_24] : memref<3x64x128xf32, #tpu.memory_space<vmem>>, vector<1x64x128xf32>
    %19 = vector.shape_cast %18 : vector<1x64x128xf32> to vector<64x128xf32>
    %cst_25 = arith.constant dense<0.000000e+00> : vector<32x128xf32>
    %20 = tpu.matmul %7, %19, %cst_25 {dimension_numbers = #tpu.dot_dimension_numbers<[1], [0], [0], [1], [0, 0, 1, 1], [], []>} : vector<32x64xf32>, vector<64x128xf32>, vector<32x128xf32> -> vector<32x128xf32>
    %21 = arith.addf %17, %20 : vector<32x128xf32>
    %c2 = arith.constant 2 : index
    %c0_26 = arith.constant 0 : index
    %c0_27 = arith.constant 0 : index
    %22 = vector.load %arg6[%c2, %c0_26, %c0_27] : memref<3x128x128xf32, #tpu.memory_space<vmem>>, vector<1x128x128xf32>
    %23 = vector.shape_cast %22 : vector<1x128x128xf32> to vector<128x128xf32>
    %cst_28 = arith.constant dense<0.000000e+00> : vector<32x128xf32>
    %24 = tpu.matmul %1, %23, %cst_28 {dimension_numbers = #tpu.dot_dimension_numbers<[1], [0], [0], [1], [0, 0, 1, 1], [], []>} : vector<32x128xf32>, vector<128x128xf32>, vector<32x128xf32> -> vector<32x128xf32>
    %c2_29 = arith.constant 2 : index
    %c0_30 = arith.constant 0 : index
    %c0_31 = arith.constant 0 : index
    %25 = vector.load %arg7[%c2_29, %c0_30, %c0_31] : memref<3x64x128xf32, #tpu.memory_space<vmem>>, vector<1x64x128xf32>
    %26 = vector.shape_cast %25 : vector<1x64x128xf32> to vector<64x128xf32>
    %cst_32 = arith.constant dense<0.000000e+00> : vector<32x128xf32>
    %27 = tpu.matmul %7, %26, %cst_32 {dimension_numbers = #tpu.dot_dimension_numbers<[1], [0], [0], [1], [0, 0, 1, 1], [], []>} : vector<32x64xf32>, vector<64x128xf32>, vector<32x128xf32> -> vector<32x128xf32>
    %28 = arith.addf %24, %27 : vector<32x128xf32>
    %cst_33 = arith.constant dense<0.000000e+00> : vector<32x128xf32>
    %29 = tpu.matmul %2, %14, %cst_33 {dimension_numbers = #tpu.dot_dimension_numbers<[1], [0], [0], [1], [0, 0, 1, 1], [], []>} : vector<32x32xf32>, vector<32x128xf32>, vector<32x128xf32> -> vector<32x128xf32>
    %30 = arith.addf %29, %21 : vector<32x128xf32>
    %cst_34 = arith.constant dense<0.000000e+00> : vector<32x128xf32>
    %31 = tpu.matmul %3, %28, %cst_34 {dimension_numbers = #tpu.dot_dimension_numbers<[1], [0], [0], [1], [0, 0, 1, 1], [], []>} : vector<32x32xf32>, vector<32x128xf32>, vector<32x128xf32> -> vector<32x128xf32>
    %32 = arith.addf %30, %31 : vector<32x128xf32>
    %c0_35 = arith.constant 0 : index
    %c0_36 = arith.constant 0 : index
    %33 = vector.load %arg8[%c0_35, %c0_36] : memref<1x128xf32, #tpu.memory_space<vmem>>, vector<1x128xf32>
    %34 = vector.broadcast %33 : vector<1x128xf32> to vector<32x128xf32>
    %35 = arith.addf %32, %34 : vector<32x128xf32>
    %cst_37 = arith.constant 0.000000e+00 : f32
    %36 = vector.broadcast %cst_37 : f32 to vector<32x128xf32>
    %37 = arith.maximumf %35, %36 : vector<32x128xf32>
    %c0_38 = arith.constant 0 : index
    %c0_39 = arith.constant 0 : index
    %c0_40 = arith.constant 0 : index
    %38 = vector.load %arg9[%c0_38, %c0_39, %c0_40] : memref<3x128x256xf32, #tpu.memory_space<vmem>>, vector<1x128x256xf32>
    %39 = vector.shape_cast %38 : vector<1x128x256xf32> to vector<128x256xf32>
    %cst_41 = arith.constant dense<0.000000e+00> : vector<32x256xf32>
    %40 = tpu.matmul %37, %39, %cst_41 {dimension_numbers = #tpu.dot_dimension_numbers<[1], [0], [0], [1], [0, 0, 1, 1], [], []>} : vector<32x128xf32>, vector<128x256xf32>, vector<32x256xf32> -> vector<32x256xf32>
    %c1_42 = arith.constant 1 : index
    %c0_43 = arith.constant 0 : index
    %c0_44 = arith.constant 0 : index
    %41 = vector.load %arg9[%c1_42, %c0_43, %c0_44] : memref<3x128x256xf32, #tpu.memory_space<vmem>>, vector<1x128x256xf32>
    %42 = vector.shape_cast %41 : vector<1x128x256xf32> to vector<128x256xf32>
    %cst_45 = arith.constant dense<0.000000e+00> : vector<32x256xf32>
    %43 = tpu.matmul %37, %42, %cst_45 {dimension_numbers = #tpu.dot_dimension_numbers<[1], [0], [0], [1], [0, 0, 1, 1], [], []>} : vector<32x128xf32>, vector<128x256xf32>, vector<32x256xf32> -> vector<32x256xf32>
    %c2_46 = arith.constant 2 : index
    %c0_47 = arith.constant 0 : index
    %c0_48 = arith.constant 0 : index
    %44 = vector.load %arg9[%c2_46, %c0_47, %c0_48] : memref<3x128x256xf32, #tpu.memory_space<vmem>>, vector<1x128x256xf32>
    %45 = vector.shape_cast %44 : vector<1x128x256xf32> to vector<128x256xf32>
    %cst_49 = arith.constant dense<0.000000e+00> : vector<32x256xf32>
    %46 = tpu.matmul %37, %45, %cst_49 {dimension_numbers = #tpu.dot_dimension_numbers<[1], [0], [0], [1], [0, 0, 1, 1], [], []>} : vector<32x128xf32>, vector<128x256xf32>, vector<32x256xf32> -> vector<32x256xf32>
    %cst_50 = arith.constant dense<0.000000e+00> : vector<32x256xf32>
    %47 = tpu.matmul %2, %40, %cst_50 {dimension_numbers = #tpu.dot_dimension_numbers<[1], [0], [0], [1], [0, 0, 1, 1], [], []>} : vector<32x32xf32>, vector<32x256xf32>, vector<32x256xf32> -> vector<32x256xf32>
    %48 = arith.addf %47, %43 : vector<32x256xf32>
    %cst_51 = arith.constant dense<0.000000e+00> : vector<32x256xf32>
    %49 = tpu.matmul %3, %46, %cst_51 {dimension_numbers = #tpu.dot_dimension_numbers<[1], [0], [0], [1], [0, 0, 1, 1], [], []>} : vector<32x32xf32>, vector<32x256xf32>, vector<32x256xf32> -> vector<32x256xf32>
    %50 = arith.addf %48, %49 : vector<32x256xf32>
    %c0_52 = arith.constant 0 : index
    %c0_53 = arith.constant 0 : index
    %51 = vector.load %arg10[%c0_52, %c0_53] : memref<1x256xf32, #tpu.memory_space<vmem>>, vector<1x256xf32>
    %52 = vector.broadcast %51 : vector<1x256xf32> to vector<32x256xf32>
    %53 = arith.addf %50, %52 : vector<32x256xf32>
    %cst_54 = arith.constant 0.000000e+00 : f32
    %54 = vector.broadcast %cst_54 : f32 to vector<32x256xf32>
    %55 = arith.maximumf %53, %54 : vector<32x256xf32>
    %c0_55 = arith.constant 0 : index
    %c0_56 = arith.constant 0 : index
    %c0_57 = arith.constant 0 : index
    %56 = vector.load %arg11[%c0_55, %c0_56, %c0_57] : memref<1x32x256xf32, #tpu.memory_space<vmem>>, vector<1x32x256xf32>
    %57 = vector.shape_cast %56 : vector<1x32x256xf32> to vector<32x256xf32>
    %58 = vector.shape_cast %55 : vector<32x256xf32> to vector<1x32x256xf32>
    tpu.vector_store %arg11[%c0_55, %c0_56, %c0_57], %58 {strides = array<i32>} : memref<1x32x256xf32, #tpu.memory_space<vmem>>, vector<1x32x256xf32>,
    return
  }
  func.func @transform_0(%arg0: i32) -> (i32, i32, i32) {
    %c0_i32 = arith.constant 0 : i32
    %c0_i32_0 = arith.constant 0 : i32
    %c0_i32_1 = arith.constant 0 : i32
    return %arg0, %c0_i32, %c0_i32_0 : i32, i32, i32
  }
  func.func @transform_1(%arg0: i32) -> (i32, i32, i32) {
    %c0_i32 = arith.constant 0 : i32
    %c0_i32_0 = arith.constant 0 : i32
    %c0_i32_1 = arith.constant 0 : i32
    return %arg0, %c0_i32, %c0_i32_0 : i32, i32, i32
  }
  func.func @transform_2(%arg0: i32) -> (i32, i32) {
    %c0_i32 = arith.constant 0 : i32
    %c0_i32_0 = arith.constant 0 : i32
    %c0_i32_1 = arith.constant 0 : i32
    return %c0_i32, %c0_i32_0 : i32, i32
  }
  func.func @transform_3(%arg0: i32) -> (i32, i32) {
    %c0_i32 = arith.constant 0 : i32
    %c0_i32_0 = arith.constant 0 : i32
    %c0_i32_1 = arith.constant 0 : i32
    return %c0_i32, %c0_i32_0 : i32, i32
  }
  func.func @transform_4(%arg0: i32) -> (i32, i32) {
    %c0_i32 = arith.constant 0 : i32
    %c0_i32_0 = arith.constant 0 : i32
    %c0_i32_1 = arith.constant 0 : i32
    return %c0_i32, %c0_i32_0 : i32, i32
  }
  func.func @transform_5(%arg0: i32) -> (i32, i32, i32) {
    %c0_i32 = arith.constant 0 : i32
    %c0_i32_0 = arith.constant 0 : i32
    %c0_i32_1 = arith.constant 0 : i32
    %c0_i32_2 = arith.constant 0 : i32
    return %c0_i32, %c0_i32_0, %c0_i32_1 : i32, i32, i32
  }
  func.func @transform_6(%arg0: i32) -> (i32, i32, i32) {
    %c0_i32 = arith.constant 0 : i32
    %c0_i32_0 = arith.constant 0 : i32
    %c0_i32_1 = arith.constant 0 : i32
    %c0_i32_2 = arith.constant 0 : i32
    return %c0_i32, %c0_i32_0, %c0_i32_1 : i32, i32, i32
  }
  func.func @transform_7(%arg0: i32) -> (i32, i32) {
    %c0_i32 = arith.constant 0 : i32
    %c0_i32_0 = arith.constant 0 : i32
    %c0_i32_1 = arith.constant 0 : i32
    return %c0_i32, %c0_i32_0 : i32, i32
  }
  func.func @transform_8(%arg0: i32) -> (i32, i32, i32) {
    %c0_i32 = arith.constant 0 : i32
    %c0_i32_0 = arith.constant 0 : i32
    %c0_i32_1 = arith.constant 0 : i32
    %c0_i32_2 = arith.constant 0 : i32
    return %c0_i32, %c0_i32_0, %c0_i32_1 : i32, i32, i32
  }
  func.func @transform_9(%arg0: i32) -> (i32, i32) {
    %c0_i32 = arith.constant 0 : i32
    %c0_i32_0 = arith.constant 0 : i32
    %c0_i32_1 = arith.constant 0 : i32
    return %c0_i32, %c0_i32_0 : i32, i32
  }
  func.func @transform_10(%arg0: i32) -> (i32, i32, i32) {
    %c0_i32 = arith.constant 0 : i32
    %c0_i32_0 = arith.constant 0 : i32
    %c0_i32_1 = arith.constant 0 : i32
    return %arg0, %c0_i32, %c0_i32_0 : i32, i32, i32
  }
}

</mosaic_0001>

<llo_original>
// kernel: tpu_custom_call.1
$region0: #{tpu_custom_call.1}
  #allocation0 [shape = 'u32[]', space=smem, size = 0x4, offset = 0x4, fixed_abs, tag = 'smem constant byte address 0x4 - core index']
  #allocation1 [shape = 'u32[144,128]{1,0:T(1,128)}', space=vmem, size = 0x12000, scoped, tag = 'internal scratch']
  %s0 = inlined_call_operand.hbm [shape: f32[2,32,128], index: 0, kind: input, shape index: {}]
  %s1 = inlined_call_operand.vmem [shape: f32[2,16,64], index: 1, kind: input, shape index: {}]
  %s2 = inlined_call_operand.vmem [shape: f32[32,16], index: 2, kind: input, shape index: {}]
  %s3 = inlined_call_operand.hbm [shape: f32[32,32], index: 3, kind: input, shape index: {}]
  %s4 = inlined_call_operand.hbm [shape: f32[32,32], index: 4, kind: input, shape index: {}]
  %s5 = inlined_call_operand.hbm [shape: f32[3,128,128], index: 5, kind: input, shape index: {}]
  %s6 = inlined_call_operand.hbm [shape: f32[3,64,128], index: 6, kind: input, shape index: {}]
  %s7 = inlined_call_operand.vmem [shape: f32[1,128], index: 7, kind: input, shape index: {}]
  %s8 = inlined_call_operand.hbm [shape: f32[3,128,256], index: 8, kind: input, shape index: {}]
  %s9 = inlined_call_operand.vmem [shape: f32[1,256], index: 9, kind: input, shape index: {}]
  %s10 = inlined_call_operand.hbm [shape: f32[2,32,256], index: 10, kind: output, shape index: {}]
  %s11 = sld [smem:[#allocation0]]
  $region97: #{tpu_custom_call.1} parent=0
    _
  %s13 = ssub.s32 1, %s11
  %s14 = scalar_select 0, %s13, %s11
  $region1: #{tpu_custom_call.1} parent=0
    #allocation2 [shape = 'u8[32768]{0}', space=vmem, size = 0x8000, scoped, tag = 'input window, operand 0']
    #allocation3 [shape = 's32[2]{0}', space=sflag, size = 0x8, scoped, tag = 'scoped memory for tpu_custom_call.1']
    #allocation4 [shape = 's32[2]{0}', space=sflag, size = 0x8, scoped, tag = 'scoped memory for tpu_custom_call.1']
    #allocation5 [shape = 'u8[16384]{0}', space=vmem, size = 0x4000, scoped, tag = 'input window, operand 3, single buffered']
    #allocation6 [shape = 's32[1]{0}', space=sflag, size = 0x4, scoped, tag = 'scoped memory for tpu_custom_call.1']
    #allocation7 [shape = 'u8[16384]{0}', space=vmem, size = 0x4000, scoped, tag = 'input window, operand 4, single buffered']
    #allocation8 [shape = 'u8[196608]{0}', space=vmem, size = 0x30000, scoped, tag = 'input window, operand 5, single buffered']
    #allocation9 [shape = 's32[1]{0}', space=sflag, size = 0x4, scoped, tag = 'scoped memory for tpu_custom_call.1']
    #allocation10 [shape = 'u8[98304]{0}', space=vmem, size = 0x18000, scoped, tag = 'input window, operand 6, single buffered']
    #allocation11 [shape = 'u8[393216]{0}', space=vmem, size = 0x60000, scoped, tag = 'input window, operand 8, single buffered']
    #allocation12 [shape = 's32[1]{0}', space=sflag, size = 0x4, scoped, tag = 'scoped memory for tpu_custom_call.1']
    #allocation13 [shape = 'u8[65536]{0}', space=vmem, size = 0x10000, scoped, tag = 'output window, operand 0']
    %15 = vsyncpa [#allocation3], 0
    %s16 = scalar_lea.sflag [#allocation3], 1
    %17 = vsyncpa %s16, 0
    %18 = vsyncpa [#allocation6], 0
    %19 = vsyncpa [#allocation9], 0
    %20 = vsyncpa [#allocation12], 0
    %21 = vsyncpa [#allocation4], 0
    %s22 = scalar_lea.sflag [#allocation4], 1
    %23 = vsyncpa %s22, 0
    loop: start=0, step=1, limit=4
    $region2: #{tpu_custom_call.1} parent=1 // loop_pre_header
      _
    $region3: #{tpu_custom_call.1} parent=1 // loop_header
      %s25 = sphi 0, %s29
      %p26 = scmp.ge.s32.totalorder %s25, 4
      %s35 = sphi 0, %s37
      %s38 = sphi 0, %s35
      %s39 = sphi 0, %s38
      %s55 = sphi 0, %s39
      %s61 = sphi 0, %s63
      %s64 = sphi 0, %s61
      %s65 = sphi 0, %s64
      %s81 = sphi 0, %s65
      %s85 = sphi 0, %s85
      %s87 = sphi 0, %s85
      %s88 = sphi 0, %s87
      %s102 = sphi 0, %s88
      %s106 = sphi 0, %s106
      %s108 = sphi 0, %s106
      %s109 = sphi 0, %s108
      %s123 = sphi 0, %s109
      %s127 = sphi 0, %s127
      %s129 = sphi 0, %s127
      %s130 = sphi 0, %s129
      %s144 = sphi 0, %s130
      %s148 = sphi 0, %s148
      %s150 = sphi 0, %s148
      %s151 = sphi 0, %s150
      %s165 = sphi 0, %s151
      %s169 = sphi 0, %s169
      %s171 = sphi 0, %s169
      %s172 = sphi 0, %s171
      %s186 = sphi 0, %s172
      %s190 = sphi 0, %s190
      %s192 = sphi 0, %s190
      %s193 = sphi 0, %s192
      %s207 = sphi 0, %s193
      %s211 = sphi 0, %s211
      %s213 = sphi 0, %s211
      %s214 = sphi 0, %s213
      %s228 = sphi 0, %s214
      %s232 = sphi 0, %s232
      %s234 = sphi 0, %s232
      %s235 = sphi 0, %s234
      %s249 = sphi 0, %s235
      %s255 = sphi 0, %s257
      %s258 = sphi 0, %s255
      %s259 = sphi 0, %s258
      %s275 = sphi 0, %s259
    $region4: #{tpu_custom_call.1} parent=1 // loop_header_branch
      %28 = sbr.rel (%p26) target = $region8
    $region5: #{tpu_custom_call.1} parent=1 // loop_body
      %s30 = ssub.s32 %s25, 1
      %s31 = ssub.s32 %s25, 2
      %s32 = sadd.s32 %s25, 1
      %s33 = ssub.s32 %s25, %s32
      %p34 = scmp.eq.s32.totalorder %s33, 0
      %s36 = sadd.s32 %s35, 1
      %s37 = scalar_select %p34, %s35, %s36
      %p40 = pneg %p34
      %p41 = scmp.eq.s32.totalorder %s25, 1
      %p42 = por %p40, %p41
      %p43 = scmp.ne.s32.totalorder %s35, %s38
      %p44 = scmp.eq.s32.totalorder %s25, 0
      %p45 = por %p43, %p44
      %p46 = scmp.ne.s32.totalorder %s35, %s38
      %p47 = scmp.eq.s32.totalorder %s30, 1
      %p48 = por %p46, %p47
      %p49 = scmp.ne.s32.totalorder %s38, %s39
      %p50 = scmp.eq.s32.totalorder %s30, 0
      %p51 = por %p49, %p50
      %p52 = scmp.ne.s32.totalorder %s38, %s39
      %p53 = scmp.eq.s32.totalorder %s31, 1
      %p54 = por %p52, %p53
      %p56 = scmp.ne.s32.totalorder %s39, %s55
      %p57 = scmp.eq.s32.totalorder %s31, 0
      %p58 = por %p56, %p57
      %s59 = ssub.s32 %s25, %s32
      %p60 = scmp.eq.s32.totalorder %s59, 0
      %s62 = sadd.s32 %s61, 1
      %s63 = scalar_select %p60, %s61, %s62
      %p66 = pneg %p60
      %p67 = scmp.eq.s32.totalorder %s25, 1
      %p68 = por %p66, %p67
      %p69 = scmp.ne.s32.totalorder %s61, %s64
      %p70 = scmp.eq.s32.totalorder %s25, 0
      %p71 = por %p69, %p70
      %p72 = scmp.ne.s32.totalorder %s61, %s64
      %p73 = scmp.eq.s32.totalorder %s30, 1
      %p74 = por %p72, %p73
      %p75 = scmp.ne.s32.totalorder %s64, %s65
      %p76 = scmp.eq.s32.totalorder %s30, 0
      %p77 = por %p75, %p76
      %p78 = scmp.ne.s32.totalorder %s64, %s65
      %p79 = scmp.eq.s32.totalorder %s31, 1
      %p80 = por %p78, %p79
      %p82 = scmp.ne.s32.totalorder %s65, %s81
      %p83 = scmp.eq.s32.totalorder %s31, 0
      %p84 = por %p82, %p83
      %s86 = sadd.s32 %s85, 1
      %p89 = scmp.eq.s32.totalorder %s25, 1
      %p90 = scmp.ne.s32.totalorder %s85, %s87
      %p91 = scmp.eq.s32.totalorder %s25, 0
      %p92 = por %p90, %p91
      %p93 = scmp.ne.s32.totalorder %s85, %s87
      %p94 = scmp.eq.s32.totalorder %s30, 1
      %p95 = por %p93, %p94
      %p96 = scmp.ne.s32.totalorder %s87, %s88
      %p97 = scmp.eq.s32.totalorder %s30, 0
      %p98 = por %p96, %p97
      %p99 = scmp.ne.s32.totalorder %s87, %s88
      %p100 = scmp.eq.s32.totalorder %s31, 1
      %p101 = por %p99, %p100
      %p103 = scmp.ne.s32.totalorder %s88, %s102
      %p104 = scmp.eq.s32.totalorder %s31, 0
      %p105 = por %p103, %p104
      %s107 = sadd.s32 %s106, 1
      %p110 = scmp.eq.s32.totalorder %s25, 1
      %p111 = scmp.ne.s32.totalorder %s106, %s108
      %p112 = scmp.eq.s32.totalorder %s25, 0
      %p113 = por %p111, %p112
      %p114 = scmp.ne.s32.totalorder %s106, %s108
      %p115 = scmp.eq.s32.totalorder %s30, 1
      %p116 = por %p114, %p115
      %p117 = scmp.ne.s32.totalorder %s108, %s109
      %p118 = scmp.eq.s32.totalorder %s30, 0
      %p119 = por %p117, %p118
      %p120 = scmp.ne.s32.totalorder %s108, %s109
      %p121 = scmp.eq.s32.totalorder %s31, 1
      %p122 = por %p120, %p121
      %p124 = scmp.ne.s32.totalorder %s109, %s123
      %p125 = scmp.eq.s32.totalorder %s31, 0
      %p126 = por %p124, %p125
      %s128 = sadd.s32 %s127, 1
      %p131 = scmp.eq.s32.totalorder %s25, 1
      %p132 = scmp.ne.s32.totalorder %s127, %s129
      %p133 = scmp.eq.s32.totalorder %s25, 0
      %p134 = por %p132, %p133
      %p135 = scmp.ne.s32.totalorder %s127, %s129
      %p136 = scmp.eq.s32.totalorder %s30, 1
      %p137 = por %p135, %p136
      %p138 = scmp.ne.s32.totalorder %s129, %s130
      %p139 = scmp.eq.s32.totalorder %s30, 0
      %p140 = por %p138, %p139
      %p141 = scmp.ne.s32.totalorder %s129, %s130
      %p142 = scmp.eq.s32.totalorder %s31, 1
      %p143 = por %p141, %p142
      %p145 = scmp.ne.s32.totalorder %s130, %s144
      %p146 = scmp.eq.s32.totalorder %s31, 0
      %p147 = por %p145, %p146
      %s149 = sadd.s32 %s148, 1
      %p152 = scmp.eq.s32.totalorder %s25, 1
      %p153 = scmp.ne.s32.totalorder %s148, %s150
      %p154 = scmp.eq.s32.totalorder %s25, 0
      %p155 = por %p153, %p154
      %p156 = scmp.ne.s32.totalorder %s148, %s150
      %p157 = scmp.eq.s32.totalorder %s30, 1
      %p158 = por %p156, %p157
      %p159 = scmp.ne.s32.totalorder %s150, %s151
      %p160 = scmp.eq.s32.totalorder %s30, 0
      %p161 = por %p159, %p160
      %p162 = scmp.ne.s32.totalorder %s150, %s151
      %p163 = scmp.eq.s32.totalorder %s31, 1
      %p164 = por %p162, %p163
      %p166 = scmp.ne.s32.totalorder %s151, %s165
      %p167 = scmp.eq.s32.totalorder %s31, 0
      %p168 = por %p166, %p167
      %s170 = sadd.s32 %s169, 1
      %p173 = scmp.eq.s32.totalorder %s25, 1
      %p174 = scmp.ne.s32.totalorder %s169, %s171
      %p175 = scmp.eq.s32.totalorder %s25, 0
      %p176 = por %p174, %p175
      %p177 = scmp.ne.s32.totalorder %s169, %s171
      %p178 = scmp.eq.s32.totalorder %s30, 1
      %p179 = por %p177, %p178
      %p180 = scmp.ne.s32.totalorder %s171, %s172
      %p181 = scmp.eq.s32.totalorder %s30, 0
      %p182 = por %p180, %p181
      %p183 = scmp.ne.s32.totalorder %s171, %s172
      %p184 = scmp.eq.s32.totalorder %s31, 1
      %p185 = por %p183, %p184
      %p187 = scmp.ne.s32.totalorder %s172, %s186
      %p188 = scmp.eq.s32.totalorder %s31, 0
      %p189 = por %p187, %p188
      %s191 = sadd.s32 %s190, 1
      %p194 = scmp.eq.s32.totalorder %s25, 1
      %p195 = scmp.ne.s32.totalorder %s190, %s192
      %p196 = scmp.eq.s32.totalorder %s25, 0
      %p197 = por %p195, %p196
      %p198 = scmp.ne.s32.totalorder %s190, %s192
      %p199 = scmp.eq.s32.totalorder %s30, 1
      %p200 = por %p198, %p199
      %p201 = scmp.ne.s32.totalorder %s192, %s193
      %p202 = scmp.eq.s32.totalorder %s30, 0
      %p203 = por %p201, %p202
      %p204 = scmp.ne.s32.totalorder %s192, %s193
      %p205 = scmp.eq.s32.totalorder %s31, 1
      %p206 = por %p204, %p205
      %p208 = scmp.ne.s32.totalorder %s193, %s207
      %p209 = scmp.eq.s32.totalorder %s31, 0
      %p210 = por %p208, %p209
      %s212 = sadd.s32 %s211, 1
      %p215 = scmp.eq.s32.totalorder %s25, 1
      %p216 = scmp.ne.s32.totalorder %s211, %s213
      %p217 = scmp.eq.s32.totalorder %s25, 0
      %p218 = por %p216, %p217
      %p219 = scmp.ne.s32.totalorder %s211, %s213
      %p220 = scmp.eq.s32.totalorder %s30, 1
      %p221 = por %p219, %p220
      %p222 = scmp.ne.s32.totalorder %s213, %s214
      %p223 = scmp.eq.s32.totalorder %s30, 0
      %p224 = por %p222, %p223
      %p225 = scmp.ne.s32.totalorder %s213, %s214
      %p226 = scmp.eq.s32.totalorder %s31, 1
      %p227 = por %p225, %p226
      %p229 = scmp.ne.s32.totalorder %s214, %s228
      %p230 = scmp.eq.s32.totalorder %s31, 0
      %p231 = por %p229, %p230
      %s233 = sadd.s32 %s232, 1
      %p236 = scmp.eq.s32.totalorder %s25, 1
      %p237 = scmp.ne.s32.totalorder %s232, %s234
      %p238 = scmp.eq.s32.totalorder %s25, 0
      %p239 = por %p237, %p238
      %p240 = scmp.ne.s32.totalorder %s232, %s234
      %p241 = scmp.eq.s32.totalorder %s30, 1
      %p242 = por %p240, %p241
      %p243 = scmp.ne.s32.totalorder %s234, %s235
      %p244 = scmp.eq.s32.totalorder %s30, 0
      %p245 = por %p243, %p244
      %p246 = scmp.ne.s32.totalorder %s234, %s235
      %p247 = scmp.eq.s32.totalorder %s31, 1
      %p248 = por %p246, %p247
      %p250 = scmp.ne.s32.totalorder %s235, %s249
      %p251 = scmp.eq.s32.totalorder %s31, 0
      %p252 = por %p250, %p251
      %s253 = ssub.s32 %s25, %s32
      %p254 = scmp.eq.s32.totalorder %s253, 0
      %s256 = sadd.s32 %s255, 1
      %s257 = scalar_select %p254, %s255, %s256
      %p260 = pneg %p254
      %p261 = scmp.eq.s32.totalorder %s25, 1
      %p262 = por %p260, %p261
      %p263 = scmp.ne.s32.totalorder %s255, %s258
      %p264 = scmp.eq.s32.totalorder %s25, 0
      %p265 = por %p263, %p264
      %p266 = scmp.ne.s32.totalorder %s255, %s258
      %p267 = scmp.eq.s32.totalorder %s30, 1
      %p268 = por %p266, %p267
      %p269 = scmp.ne.s32.totalorder %s258, %s259
      %p270 = scmp.eq.s32.totalorder %s30, 0
      %p271 = por %p269, %p270
      %p272 = scmp.ne.s32.totalorder %s258, %s259
      %p273 = scmp.eq.s32.totalorder %s31, 1
      %p274 = por %p272, %p273
      %p276 = scmp.ne.s32.totalorder %s259, %s275
      %p277 = scmp.eq.s32.totalorder %s31, 0
      %p278 = por %p276, %p277
      %p279 = scmp.le.s32.totalorder 1, %s25
      %p280 = scmp.lt.s32.totalorder %s25, 3
      %p281 = pnand %p279, %p280
      %p282 = pneg %p281
      // Predicated region
      $region9: #{tpu_custom_call.1} parent=5 // pred_check
        _
      $region10: #{tpu_custom_call.1} parent=5 // pred_check_branch
        %284 = sbr.rel (%p281) target = $region12
      $region11: #{tpu_custom_call.1} parent=5 // pred_region
        %s285 = ssub.s32 %s25, 1
        // Predicated region
        $region13: #{tpu_custom_call.1} parent=11 // pred_check
          %p286 = pneg %p98
        $region14: #{tpu_custom_call.1} parent=11 // pred_check_branch
          %288 = sbr.rel (%p286) target = $region16
        $region15: #{tpu_custom_call.1} parent=11 // pred_region
          _
        $region16: #{tpu_custom_call.1} parent=11 // pred_fallthru
          _
        // Predicated region
        $region17: #{tpu_custom_call.1} parent=11 // pred_check
          %p289 = pneg %p119
        $region18: #{tpu_custom_call.1} parent=11 // pred_check_branch
          %291 = sbr.rel (%p289) target = $region20
        $region19: #{tpu_custom_call.1} parent=11 // pred_region
          %s293 = ssub.s32 512, 512
          %294 = vsyncadd [#allocation6], %s293
          %s295 = sshll.u32 [#allocation5], 4
          %s296 = int_to_ptr.vmem [resolvable:$true] %s295
          %301 = dma.hbm_to_vmem [thread:$0]  %s3, 512, %s296, [#allocation6], 128, 128, 8
        $region20: #{tpu_custom_call.1} parent=11 // pred_fallthru
          _
        // Predicated region
        $region21: #{tpu_custom_call.1} parent=11 // pred_check
          %p302 = pneg %p140
        $region22: #{tpu_custom_call.1} parent=11 // pred_check_branch
          %304 = sbr.rel (%p302) target = $region24
        $region23: #{tpu_custom_call.1} parent=11 // pred_region
          %s306 = ssub.s32 512, 512
          %307 = vsyncadd [#allocation6], %s306
          %s308 = sshll.u32 [#allocation7], 4
          %s309 = int_to_ptr.vmem [resolvable:$true] %s308
          %314 = dma.hbm_to_vmem [thread:$0]  %s4, 512, %s309, [#allocation6], 128, 128, 8
        $region24: #{tpu_custom_call.1} parent=11 // pred_fallthru
          _
        // Predicated region
        $region25: #{tpu_custom_call.1} parent=11 // pred_check
          %p315 = pneg %p161
        $region26: #{tpu_custom_call.1} parent=11 // pred_check_branch
          %317 = sbr.rel (%p315) target = $region28
        $region27: #{tpu_custom_call.1} parent=11 // pred_region
          %s319 = ssub.s32 6144, 6144
          %320 = vsyncadd [#allocation9], %s319
          %s321 = sshll.u32 [#allocation8], 4
          %s322 = int_to_ptr.vmem [resolvable:$true] %s321
          %327 = dma.hbm_to_vmem [thread:$0]  %s5, 6144, %s322, [#allocation9], 128, 128, 8
        $region28: #{tpu_custom_call.1} parent=11 // pred_fallthru
          _
        // Predicated region
        $region29: #{tpu_custom_call.1} parent=11 // pred_check
          %p328 = pneg %p182
        $region30: #{tpu_custom_call.1} parent=11 // pred_check_branch
          %330 = sbr.rel (%p328) target = $region32
        $region31: #{tpu_custom_call.1} parent=11 // pred_region
          %s332 = ssub.s32 3072, 3072
          %333 = vsyncadd [#allocation9], %s332
          %s334 = sshll.u32 [#allocation10], 4
          %s335 = int_to_ptr.vmem [resolvable:$true] %s334
          %340 = dma.hbm_to_vmem [thread:$0]  %s6, 3072, %s335, [#allocation9], 128, 128, 8
        $region32: #{tpu_custom_call.1} parent=11 // pred_fallthru
          _
        // Predicated region
        $region33: #{tpu_custom_call.1} parent=11 // pred_check
          %p341 = pneg %p203
        $region34: #{tpu_custom_call.1} parent=11 // pred_check_branch
          %343 = sbr.rel (%p341) target = $region36
        $region35: #{tpu_custom_call.1} parent=11 // pred_region
          _
        $region36: #{tpu_custom_call.1} parent=11 // pred_fallthru
          _
        // Predicated region
        $region37: #{tpu_custom_call.1} parent=11 // pred_check
          %p344 = pneg %p224
        $region38: #{tpu_custom_call.1} parent=11 // pred_check_branch
          %346 = sbr.rel (%p344) target = $region40
        $region39: #{tpu_custom_call.1} parent=11 // pred_region
          %s348 = ssub.s32 12288, 12288
          %349 = vsyncadd [#allocation12], %s348
          %s350 = sshll.u32 [#allocation11], 4
          %s351 = int_to_ptr.vmem [resolvable:$true] %s350
          %356 = dma.hbm_to_vmem [thread:$0]  %s8, 12288, %s351, [#allocation12], 256, 256, 16
        $region40: #{tpu_custom_call.1} parent=11 // pred_fallthru
          _
        // Predicated region
        $region41: #{tpu_custom_call.1} parent=11 // pred_check
          %p357 = pneg %p245
        $region42: #{tpu_custom_call.1} parent=11 // pred_check_branch
          %359 = sbr.rel (%p357) target = $region44
        $region43: #{tpu_custom_call.1} parent=11 // pred_region
          _
        $region44: #{tpu_custom_call.1} parent=11 // pred_fallthru
          _
      $region12: #{tpu_custom_call.1} parent=5 // pred_fallthru
        _
      %p360 = scmp.lt.s32.totalorder %s25, 2
      // Predicated region
      $region45: #{tpu_custom_call.1} parent=5 // pred_check
        %p361 = pneg %p360
      $region46: #{tpu_custom_call.1} parent=5 // pred_check_branch
        %363 = sbr.rel (%p361) target = $region48
      $region47: #{tpu_custom_call.1} parent=5 // pred_region
        // Predicated region
        $region49: #{tpu_custom_call.1} parent=47 // pred_check
          %p364 = pneg %p45
        $region50: #{tpu_custom_call.1} parent=47 // pred_check_branch
          %366 = sbr.rel (%p364) target = $region52
        $region51: #{tpu_custom_call.1} parent=47 // pred_region
          %s367 = sand.u32 %s35, 1
          %s368 = scalar_lea.sflag [#allocation3], %s367
          %s369 = sand.u32 %s35, 1
          %s370 = smul.addr %s369, 32
          %s371 = scalar_lea.vmem [#allocation2], %s370
          %s373 = ssub.s32 512, 512
          %374 = vsyncadd %s368, %s373
          %s375 = smul.addr %s25, 4
          %s376 = smul.addr %s375, 128
          %s377 = scalar_lea.hbm %s0, %s376
          %s378 = sshll.u32 %s371, 4
          %s379 = int_to_ptr.vmem [resolvable:$true] %s378
          %384 = dma.hbm_to_vmem [thread:$0]  %s377, 512, %s379, %s368, 128, 128, 8
        $region52: #{tpu_custom_call.1} parent=47 // pred_fallthru
          _
        // Predicated region
        $region53: #{tpu_custom_call.1} parent=47 // pred_check
          %p385 = pneg %p71
        $region54: #{tpu_custom_call.1} parent=47 // pred_check_branch
          %387 = sbr.rel (%p385) target = $region56
        $region55: #{tpu_custom_call.1} parent=47 // pred_region
          %p388 = scmp.lt.s32.totalorder %s25, 1
          %s389 = scalar_select %p388, %s25, 1
          %s390 = smul.addr %s389, 2
          %s391 = smul.addr %s390, 8
          %s392 = scalar_lea.vmem %s1, %s391
        $region56: #{tpu_custom_call.1} parent=47 // pred_fallthru
          _
      $region48: #{tpu_custom_call.1} parent=5 // pred_fallthru
        _
      %p393 = scmp.le.s32.totalorder 1, %s25
      %p394 = scmp.lt.s32.totalorder %s25, 3
      %p395 = pnand %p393, %p394
      %p396 = pneg %p395
      // Predicated region
      $region57: #{tpu_custom_call.1} parent=5 // pred_check
        _
      $region58: #{tpu_custom_call.1} parent=5 // pred_check_branch
        %398 = sbr.rel (%p395) target = $region60
      $region59: #{tpu_custom_call.1} parent=5 // pred_region
        %s399 = ssub.s32 %s25, 1
        %s400 = sand.u32 %s38, 1
        %s401 = scalar_lea.sflag [#allocation3], %s400
        %s402 = sand.u32 %s38, 1
        %s403 = smul.addr %s402, 32
        %s404 = scalar_lea.vmem [#allocation2], %s403
        // Predicated region
        $region61: #{tpu_custom_call.1} parent=59 // pred_check
          %p405 = pneg %p51
        $region62: #{tpu_custom_call.1} parent=59 // pred_check_branch
          %407 = sbr.rel (%p405) target = $region64
        $region63: #{tpu_custom_call.1} parent=59 // pred_region
          %408 = dma.done %s401, 512
        $region64: #{tpu_custom_call.1} parent=59 // pred_fallthru
          _
        // Predicated region
        $region65: #{tpu_custom_call.1} parent=59 // pred_check
          %p409 = pneg %p119
        $region66: #{tpu_custom_call.1} parent=59 // pred_check_branch
          %411 = sbr.rel (%p409) target = $region68
        $region67: #{tpu_custom_call.1} parent=59 // pred_region
          %412 = dma.done [#allocation6], 512
        $region68: #{tpu_custom_call.1} parent=59 // pred_fallthru
          _
        // Predicated region
        $region69: #{tpu_custom_call.1} parent=59 // pred_check
          %p413 = pneg %p140
        $region70: #{tpu_custom_call.1} parent=59 // pred_check_branch
          %415 = sbr.rel (%p413) target = $region72
        $region71: #{tpu_custom_call.1} parent=59 // pred_region
          %416 = dma.done [#allocation6], 512
        $region72: #{tpu_custom_call.1} parent=59 // pred_fallthru
          _
        // Predicated region
        $region73: #{tpu_custom_call.1} parent=59 // pred_check
          %p417 = pneg %p161
        $region74: #{tpu_custom_call.1} parent=59 // pred_check_branch
          %419 = sbr.rel (%p417) target = $region76
        $region75: #{tpu_custom_call.1} parent=59 // pred_region
          %420 = dma.done [#allocation9], 6144
        $region76: #{tpu_custom_call.1} parent=59 // pred_fallthru
          _
        // Predicated region
        $region77: #{tpu_custom_call.1} parent=59 // pred_check
          %p421 = pneg %p182
        $region78: #{tpu_custom_call.1} parent=59 // pred_check_branch
          %423 = sbr.rel (%p421) target = $region80
        $region79: #{tpu_custom_call.1} parent=59 // pred_region
          %424 = dma.done [#allocation9], 3072
        $region80: #{tpu_custom_call.1} parent=59 // pred_fallthru
          _
        // Predicated region
        $region81: #{tpu_custom_call.1} parent=59 // pred_check
          %p425 = pneg %p224
        $region82: #{tpu_custom_call.1} parent=59 // pred_check_branch
          %427 = sbr.rel (%p425) target = $region84
        $region83: #{tpu_custom_call.1} parent=59 // pred_region
          %428 = dma.done [#allocation12], 12288
        $region84: #{tpu_custom_call.1} parent=59 // pred_fallthru
          _
        %s429 = sand.u32 %s38, 1
        %s430 = scalar_lea.sflag [#allocation3], %s429
        %s431 = sand.u32 %s38, 1
        %s432 = smul.addr %s431, 32
        %s433 = scalar_lea.vmem [#allocation2], %s432
        %p434 = pneg %p51
        %p435 = pneg %p48
        %p436 = scmp.lt.s32.totalorder %s30, 1
        %s437 = scalar_select %p436, %s30, 1
        %s438 = smul.addr %s437, 2
        %s439 = smul.addr %s438, 8
        %s440 = scalar_lea.vmem %s1, %s439
        %p441 = pneg %p77
        %p442 = pneg %p74
        %p443 = pneg %p98
        %p444 = pneg %p95
        %p445 = pneg %p119
        %p446 = pneg %p116
        %p447 = pneg %p140
        %p448 = pneg %p137
        %p449 = pneg %p161
        %p450 = pneg %p158
        %p451 = pneg %p182
        %p452 = pneg %p179
        %p453 = pneg %p203
        %p454 = pneg %p200
        %p455 = pneg %p224
        %p456 = pneg %p221
        %p457 = pneg %p245
        %p458 = pneg %p242
        %p459 = pneg %p271
        %p460 = pneg %p268
        %s461 = sand.u32 %s258, 1
        %s462 = scalar_lea.sflag [#allocation4], %s461
        %s463 = sand.u32 %s258, 1
        %s464 = smul.addr %s463, 64
        %s465 = scalar_lea.vmem [#allocation13], %s464
        %p466 = scmp.lt.s32.totalorder %s30, 1
        %s467 = scalar_select %p466, %s30, 1
        %s468 = smul.addr %s467, 2
        %s469 = smul.addr %s468, 8
        %s470 = scalar_lea.vmem %s1, %s469
        %v471 = vld [vmem:[%s404] sm:$0xff]
        %v472 = vld [vmem:[%s404 + $0x8] sm:$0xff]
        %v473 = vld [vmem:[%s404 + $0x10] sm:$0xff]
        %v474 = vld [vmem:[%s404 + $0x18] sm:$0xff]
        %v475 = vld [vmem:[#allocation5] sm:$0xff]
        %v476 = vld [vmem:[#allocation5 + $0x8] sm:$0xff]
        %v477 = vld [vmem:[#allocation5 + $0x10] sm:$0xff]
        %v478 = vld [vmem:[#allocation5 + $0x18] sm:$0xff]
        %v479 = vld [vmem:[#allocation7] sm:$0xff]
        %v480 = vld [vmem:[#allocation7 + $0x8] sm:$0xff]
        %v481 = vld [vmem:[#allocation7 + $0x10] sm:$0xff]
        %v482 = vld [vmem:[#allocation7 + $0x18] sm:$0xff]
        %v483 = vld [vmem:[%s2] sm:$0xff]
        %v484 = vld [vmem:[%s2 + $0x8] sm:$0xff]
        %v485 = vld [vmem:[%s2 + $0x10] sm:$0xff]
        %v486 = vld [vmem:[%s2 + $0x18] sm:$0xff]
        %v487 = vld [vmem:[%s470] sm:$0xff]
        %v488 = vld [vmem:[%s470 + $0x8] sm:$0xff]
        %vm489 = vcmask 130048
        %v491 = vsel %vm489, %v483, 0
        %v494 = vsel %vm489, %v484, 0
        %v497 = vsel %vm489, %v485, 0
        %v500 = vsel %vm489, %v486, 0
        %502 = vmatprep.subr.mxu0 0.0
        %503 = vmatpush1.msra.mxu0 %v487
        %504 = vmatprep.subr.mxu0 0.0
        %505 = vmatpush1.msra.mxu0 %v488
        %506 = vmatprep.subr.mxu0 0.0
        %507 = vmatpush1.msra.mxu0 0.0
        %508 = vmatprep.subr.mxu0 0.0
        %509 = vmatpush1.msra.mxu0 0.0
        %510 = vmatprep.subr.mxu0 0.0
        %511 = vmatpush1.msra.mxu0 0.0
        %512 = vmatprep.subr.mxu0 0.0
        %513 = vmatpush1.msra.mxu0 0.0
        %514 = vmatprep.subr.mxu0 0.0
        %515 = vmatpush1.msra.mxu0 0.0
        %516 = vmatprep.subr.mxu0 0.0
        %517 = vmatpush1.msra.mxu0 0.0
        %518 = vmatprep.subr.mxu0 0.0
        %519 = vmatpush1.msra.mxu0 0.0
        %520 = vmatprep.subr.mxu0 0.0
        %521 = vmatpush1.msra.mxu0 0.0
        %522 = vmatprep.subr.mxu0 0.0
        %523 = vmatpush1.msra.mxu0 0.0
        %524 = vmatprep.subr.mxu0 0.0
        %525 = vmatpush1.msra.mxu0 0.0
        %526 = vmatprep.subr.mxu0 0.0
        %527 = vmatpush1.msra.mxu0 0.0
        %528 = vmatprep.subr.mxu0 0.0
        %529 = vmatpush1.msra.mxu0 0.0
        %530 = vmatprep.subr.mxu0 0.0
        %531 = vmatpush1.msra.mxu0 0.0
        %532 = vmatprep.subr.mxu0 0.0
        %533 = vmatpush1.msra.mxu0 0.0
        %534 = vmatprep.subr.mxu0 0.0
        %535 = vmatpush1.msra.mxu0 0.0
        %536 = vmatprep.subr.mxu0 0.0
        %537 = vmatpush1.msra.mxu0 0.0
        %538 = vmatprep.subr.mxu0 0.0
        %539 = vmatpush1.msra.mxu0 0.0
        %540 = vmatprep.subr.mxu0 0.0
        %541 = vmatpush1.msra.mxu0 0.0
        %542 = vmatprep.subr.mxu0 0.0
        %543 = vmatpush1.msra.mxu0 0.0
        %544 = vmatprep.subr.mxu0 0.0
        %545 = vmatpush1.msra.mxu0 0.0
        %546 = vmatprep.subr.mxu0 0.0
        %547 = vmatpush1.msra.mxu0 0.0
        %548 = vmatprep.subr.mxu0 0.0
        %549 = vmatpush1.msra.mxu0 0.0
        %550 = vmatprep.subr.mxu0 0.0
        %551 = vmatpush1.msra.mxu0 0.0
        %552 = vmatprep.subr.mxu0 0.0
        %553 = vmatpush1.msra.mxu0 0.0
        %554 = vmatprep.subr.mxu0 0.0
        %555 = vmatpush1.msra.mxu0 0.0
        %556 = vmatprep.subr.mxu0 0.0
        %557 = vmatpush1.msra.mxu0 0.0
        %558 = vmatprep.subr.mxu0 0.0
        %559 = vmatpush1.msra.mxu0 0.0
        %560 = vmatprep.subr.mxu0 0.0
        %561 = vmatpush1.msra.mxu0 0.0
        %562 = vmatprep.subr.mxu0 0.0
        %563 = vmatpush1.msra.mxu0 0.0
        %564 = vmatprep.subr.mxu0 0.0
        %565 = vmatpush1.msra.mxu0 0.0
        %566 = vmatprep.mubr.f32.mxu0 0.0
        %567 = vmatmul.mubr.f32.gmra.mrb[0].mxu0 %v491
        %v568 = vpop.f32.mrb[0].mxu0
        %v569 = vadd.f32 0.0, %v568
        %v570 = vpop.f32.mrb[0].mxu0
        %571 = vmatprep.mubr.f32.mxu0 0.0
        %572 = vmatmul.mubr.f32.gmra.mrb[0].mxu0 %v494
        %v573 = vpop.f32.mrb[0].mxu0
        %v574 = vadd.f32 0.0, %v573
        %v575 = vpop.f32.mrb[0].mxu0
        %576 = vmatprep.mubr.f32.mxu0 0.0
        %577 = vmatmul.mubr.f32.gmra.mrb[0].mxu0 %v497
        %v578 = vpop.f32.mrb[0].mxu0
        %v579 = vadd.f32 0.0, %v578
        %v580 = vpop.f32.mrb[0].mxu0
        %581 = vmatprep.mubr.f32.mxu0 0.0
        %582 = vmatmul.mubr.f32.gmra.mrb[0].mxu0 %v500
        %v583 = vpop.f32.mrb[0].mxu0
        %v584 = vadd.f32 0.0, %v583
        %v585 = vpop.f32.mrb[0].mxu0
        %586 = vdwg.mxu0
        %v587 = vld [vmem:[#allocation8] sm:$0xff]
        %v588 = vld [vmem:[#allocation8 + $0x8] sm:$0xff]
        %v589 = vld [vmem:[#allocation8 + $0x10] sm:$0xff]
        %v590 = vld [vmem:[#allocation8 + $0x18] sm:$0xff]
        %v591 = vld [vmem:[#allocation8 + $0x20] sm:$0xff]
        %v592 = vld [vmem:[#allocation8 + $0x28] sm:$0xff]
        %v593 = vld [vmem:[#allocation8 + $0x30] sm:$0xff]
        %v594 = vld [vmem:[#allocation8 + $0x38] sm:$0xff]
        %v595 = vld [vmem:[#allocation8 + $0x40] sm:$0xff]
        %v596 = vld [vmem:[#allocation8 + $0x48] sm:$0xff]
        %v597 = vld [vmem:[#allocation8 + $0x50] sm:$0xff]
        %v598 = vld [vmem:[#allocation8 + $0x58] sm:$0xff]
        %v599 = vld [vmem:[#allocation8 + $0x60] sm:$0xff]
        %v600 = vld [vmem:[#allocation8 + $0x68] sm:$0xff]
        %v601 = vld [vmem:[#allocation8 + $0x70] sm:$0xff]
        %v602 = vld [vmem:[#allocation8 + $0x78] sm:$0xff]
        %v603 = vld [vmem:[#allocation10] sm:$0xff]
        %v604 = vld [vmem:[#allocation10 + $0x8] sm:$0xff]
        %v605 = vld [vmem:[#allocation10 + $0x10] sm:$0xff]
        %v606 = vld [vmem:[#allocation10 + $0x18] sm:$0xff]
        %v607 = vld [vmem:[#allocation10 + $0x20] sm:$0xff]
        %v608 = vld [vmem:[#allocation10 + $0x28] sm:$0xff]
        %v609 = vld [vmem:[#allocation10 + $0x30] sm:$0xff]
        %v610 = vld [vmem:[#allocation10 + $0x38] sm:$0xff]
        %vm611 = vcmask 523264
        %v613 = vsel %vm611, %v569, 0
        %v616 = vsel %vm611, %v574, 0
        %v619 = vsel %vm611, %v579, 0
        %v622 = vsel %vm611, %v584, 0
        %624 = vmatprep.subr.mxu0 0.0
        %625 = vmatpush1.msra.mxu0 %v603
        %626 = vmatprep.subr.mxu0 0.0
        %627 = vmatpush1.msra.mxu0 %v604
        %628 = vmatprep.subr.mxu0 0.0
        %629 = vmatpush1.msra.mxu0 %v605
        %630 = vmatprep.subr.mxu0 0.0
        %631 = vmatpush1.msra.mxu0 %v606
        %632 = vmatprep.subr.mxu0 0.0
        %633 = vmatpush1.msra.mxu0 %v607
        %634 = vmatprep.subr.mxu0 0.0
        %635 = vmatpush1.msra.mxu0 %v608
        %636 = vmatprep.subr.mxu0 0.0
        %637 = vmatpush1.msra.mxu0 %v609
        %638 = vmatprep.subr.mxu0 0.0
        %639 = vmatpush1.msra.mxu0 %v610
        %640 = vmatprep.subr.mxu0 0.0
        %641 = vmatpush1.msra.mxu0 0.0
        %642 = vmatprep.subr.mxu0 0.0
        %643 = vmatpush1.msra.mxu0 0.0
        %644 = vmatprep.subr.mxu0 0.0
        %645 = vmatpush1.msra.mxu0 0.0
        %646 = vmatprep.subr.mxu0 0.0
        %647 = vmatpush1.msra.mxu0 0.0
        %648 = vmatprep.subr.mxu0 0.0
        %649 = vmatpush1.msra.mxu0 0.0
        %650 = vmatprep.subr.mxu0 0.0
        %651 = vmatpush1.msra.mxu0 0.0
        %652 = vmatprep.subr.mxu0 0.0
        %653 = vmatpush1.msra.mxu0 0.0
        %654 = vmatprep.subr.mxu0 0.0
        %655 = vmatpush1.msra.mxu0 0.0
        %656 = vmatprep.subr.mxu0 0.0
        %657 = vmatpush1.msra.mxu0 0.0
        %658 = vmatprep.subr.mxu0 0.0
        %659 = vmatpush1.msra.mxu0 0.0
        %660 = vmatprep.subr.mxu0 0.0
        %661 = vmatpush1.msra.mxu0 0.0
        %662 = vmatprep.subr.mxu0 0.0
        %663 = vmatpush1.msra.mxu0 0.0
        %664 = vmatprep.subr.mxu0 0.0
        %665 = vmatpush1.msra.mxu0 0.0
        %666 = vmatprep.subr.mxu0 0.0
        %667 = vmatpush1.msra.mxu0 0.0
        %668 = vmatprep.subr.mxu0 0.0
        %669 = vmatpush1.msra.mxu0 0.0
        %670 = vmatprep.subr.mxu0 0.0
        %671 = vmatpush1.msra.mxu0 0.0
        %672 = vmatprep.subr.mxu0 0.0
        %673 = vmatpush1.msra.mxu0 0.0
        %674 = vmatprep.subr.mxu0 0.0
        %675 = vmatpush1.msra.mxu0 0.0
        %676 = vmatprep.subr.mxu0 0.0
        %677 = vmatpush1.msra.mxu0 0.0
        %678 = vmatprep.subr.mxu0 0.0
        %679 = vmatpush1.msra.mxu0 0.0
        %680 = vmatprep.subr.mxu0 0.0
        %681 = vmatpush1.msra.mxu0 0.0
        %682 = vmatprep.subr.mxu0 0.0
        %683 = vmatpush1.msra.mxu0 0.0
        %684 = vmatprep.subr.mxu0 0.0
        %685 = vmatpush1.msra.mxu0 0.0
        %686 = vmatprep.subr.mxu0 0.0
        %687 = vmatpush1.msra.mxu0 0.0
        %688 = vmatprep.mubr.f32.mxu0 0.0
        %689 = vmatmul.mubr.f32.gmra.mrb[0].mxu0 %v613
        %v690 = vpop.f32.mrb[0].mxu0
        %v691 = vadd.f32 0.0, %v690
        %v692 = vpop.f32.mrb[0].mxu0
        %693 = vmatprep.mubr.f32.mxu0 0.0
        %694 = vmatmul.mubr.f32.gmra.mrb[0].mxu0 %v616
        %v695 = vpop.f32.mrb[0].mxu0
        %v696 = vadd.f32 0.0, %v695
        %v697 = vpop.f32.mrb[0].mxu0
        %698 = vmatprep.mubr.f32.mxu0 0.0
        %699 = vmatmul.mubr.f32.gmra.mrb[0].mxu0 %v619
        %v700 = vpop.f32.mrb[0].mxu0
        %v701 = vadd.f32 0.0, %v700
        %v702 = vpop.f32.mrb[0].mxu0
        %703 = vmatprep.mubr.f32.mxu0 0.0
        %704 = vmatmul.mubr.f32.gmra.mrb[0].mxu0 %v622
        %v705 = vpop.f32.mrb[0].mxu0
        %v706 = vadd.f32 0.0, %v705
        %v707 = vpop.f32.mrb[0].mxu0
        %708 = vdwg.mxu0
        %709 = vmatprep.subr.mxu0 0.0
        %710 = vmatpush1.msra.mxu0 %v587
        %711 = vmatprep.subr.mxu0 0.0
        %712 = vmatpush1.msra.mxu0 %v588
        %713 = vmatprep.subr.mxu0 0.0
        %714 = vmatpush1.msra.mxu0 %v589
        %715 = vmatprep.subr.mxu0 0.0
        %716 = vmatpush1.msra.mxu0 %v590
        %717 = vmatprep.subr.mxu0 0.0
        %718 = vmatpush1.msra.mxu0 %v591
        %719 = vmatprep.subr.mxu0 0.0
        %720 = vmatpush1.msra.mxu0 %v592
        %721 = vmatprep.subr.mxu0 0.0
        %722 = vmatpush1.msra.mxu0 %v593
        %723 = vmatprep.subr.mxu0 0.0
        %724 = vmatpush1.msra.mxu0 %v594
        %725 = vmatprep.subr.mxu0 0.0
        %726 = vmatpush1.msra.mxu0 %v595
        %727 = vmatprep.subr.mxu0 0.0
        %728 = vmatpush1.msra.mxu0 %v596
        %729 = vmatprep.subr.mxu0 0.0
        %730 = vmatpush1.msra.mxu0 %v597
        %731 = vmatprep.subr.mxu0 0.0
        %732 = vmatpush1.msra.mxu0 %v598
        %733 = vmatprep.subr.mxu0 0.0
        %734 = vmatpush1.msra.mxu0 %v599
        %735 = vmatprep.subr.mxu0 0.0
        %736 = vmatpush1.msra.mxu0 %v600
        %737 = vmatprep.subr.mxu0 0.0
        %738 = vmatpush1.msra.mxu0 %v601
        %739 = vmatprep.subr.mxu0 0.0
        %740 = vmatpush1.msra.mxu0 %v602
        %741 = vmatprep.subr.mxu0 0.0
        %742 = vmatpush1.msra.mxu0 0.0
        %743 = vmatprep.subr.mxu0 0.0
        %744 = vmatpush1.msra.mxu0 0.0
        %745 = vmatprep.subr.mxu0 0.0
        %746 = vmatpush1.msra.mxu0 0.0
        %747 = vmatprep.subr.mxu0 0.0
        %748 = vmatpush1.msra.mxu0 0.0
        %749 = vmatprep.subr.mxu0 0.0
        %750 = vmatpush1.msra.mxu0 0.0
        %751 = vmatprep.subr.mxu0 0.0
        %752 = vmatpush1.msra.mxu0 0.0
        %753 = vmatprep.subr.mxu0 0.0
        %754 = vmatpush1.msra.mxu0 0.0
        %755 = vmatprep.subr.mxu0 0.0
        %756 = vmatpush1.msra.mxu0 0.0
        %757 = vmatprep.subr.mxu0 0.0
        %758 = vmatpush1.msra.mxu0 0.0
        %759 = vmatprep.subr.mxu0 0.0
        %760 = vmatpush1.msra.mxu0 0.0
        %761 = vmatprep.subr.mxu0 0.0
        %762 = vmatpush1.msra.mxu0 0.0
        %763 = vmatprep.subr.mxu0 0.0
        %764 = vmatpush1.msra.mxu0 0.0
        %765 = vmatprep.subr.mxu0 0.0
        %766 = vmatpush1.msra.mxu0 0.0
        %767 = vmatprep.subr.mxu0 0.0
        %768 = vmatpush1.msra.mxu0 0.0
        %769 = vmatprep.subr.mxu0 0.0
        %770 = vmatpush1.msra.mxu0 0.0
        %771 = vmatprep.subr.mxu0 0.0
        %772 = vmatpush1.msra.mxu0 0.0
        %773 = vmatprep.mubr.f32.mxu0 0.0
        %774 = vmatmul.mubr.f32.gmra.mrb[0].mxu0 %v471
        %v775 = vpop.f32.mrb[0].mxu0
        %v776 = vadd.f32 %v691, %v775
        %v777 = vpop.f32.mrb[0].mxu0
        %778 = vmatprep.mubr.f32.mxu0 0.0
        %779 = vmatmul.mubr.f32.gmra.mrb[0].mxu0 %v472
        %v780 = vpop.f32.mrb[0].mxu0
        %v781 = vadd.f32 %v696, %v780
        %v782 = vpop.f32.mrb[0].mxu0
        %783 = vmatprep.mubr.f32.mxu0 0.0
        %784 = vmatmul.mubr.f32.gmra.mrb[0].mxu0 %v473
        %v785 = vpop.f32.mrb[0].mxu0
        %v786 = vadd.f32 %v701, %v785
        %v787 = vpop.f32.mrb[0].mxu0
        %788 = vmatprep.mubr.f32.mxu0 0.0
        %789 = vmatmul.mubr.f32.gmra.mrb[0].mxu0 %v474
        %v790 = vpop.f32.mrb[0].mxu0
        %v791 = vadd.f32 %v706, %v790
        %v792 = vpop.f32.mrb[0].mxu0
        %793 = vdwg.mxu0
        %s794 = scalar_lea.vmem [#allocation8], 128
        %v795 = vld [vmem:[%s794] sm:$0xff]
        %v796 = vld [vmem:[%s794 + $0x8] sm:$0xff]
        %v797 = vld [vmem:[%s794 + $0x10] sm:$0xff]
        %v798 = vld [vmem:[%s794 + $0x18] sm:$0xff]
        %v799 = vld [vmem:[%s794 + $0x20] sm:$0xff]
        %v800 = vld [vmem:[%s794 + $0x28] sm:$0xff]
        %v801 = vld [vmem:[%s794 + $0x30] sm:$0xff]
        %v802 = vld [vmem:[%s794 + $0x38] sm:$0xff]
        %v803 = vld [vmem:[%s794 + $0x40] sm:$0xff]
        %v804 = vld [vmem:[%s794 + $0x48] sm:$0xff]
        %v805 = vld [vmem:[%s794 + $0x50] sm:$0xff]
        %v806 = vld [vmem:[%s794 + $0x58] sm:$0xff]
        %v807 = vld [vmem:[%s794 + $0x60] sm:$0xff]
        %v808 = vld [vmem:[%s794 + $0x68] sm:$0xff]
        %v809 = vld [vmem:[%s794 + $0x70] sm:$0xff]
        %v810 = vld [vmem:[%s794 + $0x78] sm:$0xff]
        %s811 = scalar_lea.vmem [#allocation10], 64
        %v812 = vld [vmem:[%s811] sm:$0xff]
        %v813 = vld [vmem:[%s811 + $0x8] sm:$0xff]
        %v814 = vld [vmem:[%s811 + $0x10] sm:$0xff]
        %v815 = vld [vmem:[%s811 + $0x18] sm:$0xff]
        %v816 = vld [vmem:[%s811 + $0x20] sm:$0xff]
        %v817 = vld [vmem:[%s811 + $0x28] sm:$0xff]
        %v818 = vld [vmem:[%s811 + $0x30] sm:$0xff]
        %v819 = vld [vmem:[%s811 + $0x38] sm:$0xff]
        %820 = vmatprep.subr.mxu0 0.0
        %821 = vmatpush1.msra.mxu0 %v812
        %822 = vmatprep.subr.mxu0 0.0
        %823 = vmatpush1.msra.mxu0 %v813
        %824 = vmatprep.subr.mxu0 0.0
        %825 = vmatpush1.msra.mxu0 %v814
        %826 = vmatprep.subr.mxu0 0.0
        %827 = vmatpush1.msra.mxu0 %v815
        %828 = vmatprep.subr.mxu0 0.0
        %829 = vmatpush1.msra.mxu0 %v816
        %830 = vmatprep.subr.mxu0 0.0
        %831 = vmatpush1.msra.mxu0 %v817
        %832 = vmatprep.subr.mxu0 0.0
        %833 = vmatpush1.msra.mxu0 %v818
        %834 = vmatprep.subr.mxu0 0.0
        %835 = vmatpush1.msra.mxu0 %v819
        %836 = vmatprep.subr.mxu0 0.0
        %837 = vmatpush1.msra.mxu0 0.0
        %838 = vmatprep.subr.mxu0 0.0
        %839 = vmatpush1.msra.mxu0 0.0
        %840 = vmatprep.subr.mxu0 0.0
        %841 = vmatpush1.msra.mxu0 0.0
        %842 = vmatprep.subr.mxu0 0.0
        %843 = vmatpush1.msra.mxu0 0.0
        %844 = vmatprep.subr.mxu0 0.0
        %845 = vmatpush1.msra.mxu0 0.0
        %846 = vmatprep.subr.mxu0 0.0
        %847 = vmatpush1.msra.mxu0 0.0
        %848 = vmatprep.subr.mxu0 0.0
        %849 = vmatpush1.msra.mxu0 0.0
        %850 = vmatprep.subr.mxu0 0.0
        %851 = vmatpush1.msra.mxu0 0.0
        %852 = vmatprep.subr.mxu0 0.0
        %853 = vmatpush1.msra.mxu0 0.0
        %854 = vmatprep.subr.mxu0 0.0
        %855 = vmatpush1.msra.mxu0 0.0
        %856 = vmatprep.subr.mxu0 0.0
        %857 = vmatpush1.msra.mxu0 0.0
        %858 = vmatprep.subr.mxu0 0.0
        %859 = vmatpush1.msra.mxu0 0.0
        %860 = vmatprep.subr.mxu0 0.0
        %861 = vmatpush1.msra.mxu0 0.0
        %862 = vmatprep.subr.mxu0 0.0
        %863 = vmatpush1.msra.mxu0 0.0
        %864 = vmatprep.subr.mxu0 0.0
        %865 = vmatpush1.msra.mxu0 0.0
        %866 = vmatprep.subr.mxu0 0.0
        %867 = vmatpush1.msra.mxu0 0.0
        %868 = vmatprep.subr.mxu0 0.0
        %869 = vmatpush1.msra.mxu0 0.0
        %870 = vmatprep.subr.mxu0 0.0
        %871 = vmatpush1.msra.mxu0 0.0
        %872 = vmatprep.subr.mxu0 0.0
        %873 = vmatpush1.msra.mxu0 0.0
        %874 = vmatprep.subr.mxu0 0.0
        %875 = vmatpush1.msra.mxu0 0.0
        %876 = vmatprep.subr.mxu0 0.0
        %877 = vmatpush1.msra.mxu0 0.0
        %878 = vmatprep.subr.mxu0 0.0
        %879 = vmatpush1.msra.mxu0 0.0
        %880 = vmatprep.subr.mxu0 0.0
        %881 = vmatpush1.msra.mxu0 0.0
        %882 = vmatprep.subr.mxu0 0.0
        %883 = vmatpush1.msra.mxu0 0.0
        %884 = vmatprep.mubr.f32.mxu0 0.0
        %885 = vmatmul.mubr.f32.gmra.mrb[0].mxu0 %v613
        %v886 = vpop.f32.mrb[0].mxu0
        %v887 = vadd.f32 0.0, %v886
        %v888 = vpop.f32.mrb[0].mxu0
        %889 = vmatprep.mubr.f32.mxu0 0.0
        %890 = vmatmul.mubr.f32.gmra.mrb[0].mxu0 %v616
        %v891 = vpop.f32.mrb[0].mxu0
        %v892 = vadd.f32 0.0, %v891
        %v893 = vpop.f32.mrb[0].mxu0
        %894 = vmatprep.mubr.f32.mxu0 0.0
        %895 = vmatmul.mubr.f32.gmra.mrb[0].mxu0 %v619
        %v896 = vpop.f32.mrb[0].mxu0
        %v897 = vadd.f32 0.0, %v896
        %v898 = vpop.f32.mrb[0].mxu0
        %899 = vmatprep.mubr.f32.mxu0 0.0
        %900 = vmatmul.mubr.f32.gmra.mrb[0].mxu0 %v622
        %v901 = vpop.f32.mrb[0].mxu0
        %v902 = vadd.f32 0.0, %v901
        %v903 = vpop.f32.mrb[0].mxu0
        %904 = vdwg.mxu0
        %905 = vmatprep.subr.mxu0 0.0
        %906 = vmatpush1.msra.mxu0 %v795
        %907 = vmatprep.subr.mxu0 0.0
        %908 = vmatpush1.msra.mxu0 %v796
        %909 = vmatprep.subr.mxu0 0.0
        %910 = vmatpush1.msra.mxu0 %v797
        %911 = vmatprep.subr.mxu0 0.0
        %912 = vmatpush1.msra.mxu0 %v798
        %913 = vmatprep.subr.mxu0 0.0
        %914 = vmatpush1.msra.mxu0 %v799
        %915 = vmatprep.subr.mxu0 0.0
        %916 = vmatpush1.msra.mxu0 %v800
        %917 = vmatprep.subr.mxu0 0.0
        %918 = vmatpush1.msra.mxu0 %v801
        %919 = vmatprep.subr.mxu0 0.0
        %920 = vmatpush1.msra.mxu0 %v802
        %921 = vmatprep.subr.mxu0 0.0
        %922 = vmatpush1.msra.mxu0 %v803
        %923 = vmatprep.subr.mxu0 0.0
        %924 = vmatpush1.msra.mxu0 %v804
        %925 = vmatprep.subr.mxu0 0.0
        %926 = vmatpush1.msra.mxu0 %v805
        %927 = vmatprep.subr.mxu0 0.0
        %928 = vmatpush1.msra.mxu0 %v806
        %929 = vmatprep.subr.mxu0 0.0
        %930 = vmatpush1.msra.mxu0 %v807
        %931 = vmatprep.subr.mxu0 0.0
        %932 = vmatpush1.msra.mxu0 %v808
        %933 = vmatprep.subr.mxu0 0.0
        %934 = vmatpush1.msra.mxu0 %v809
        %935 = vmatprep.subr.mxu0 0.0
        %936 = vmatpush1.msra.mxu0 %v810
        %937 = vmatprep.subr.mxu0 0.0
        %938 = vmatpush1.msra.mxu0 0.0
        %939 = vmatprep.subr.mxu0 0.0
        %940 = vmatpush1.msra.mxu0 0.0
        %941 = vmatprep.subr.mxu0 0.0
        %942 = vmatpush1.msra.mxu0 0.0
        %943 = vmatprep.subr.mxu0 0.0
        %944 = vmatpush1.msra.mxu0 0.0
        %945 = vmatprep.subr.mxu0 0.0
        %946 = vmatpush1.msra.mxu0 0.0
        %947 = vmatprep.subr.mxu0 0.0
        %948 = vmatpush1.msra.mxu0 0.0
        %949 = vmatprep.subr.mxu0 0.0
        %950 = vmatpush1.msra.mxu0 0.0
        %951 = vmatprep.subr.mxu0 0.0
        %952 = vmatpush1.msra.mxu0 0.0
        %953 = vmatprep.subr.mxu0 0.0
        %954 = vmatpush1.msra.mxu0 0.0
        %955 = vmatprep.subr.mxu0 0.0
        %956 = vmatpush1.msra.mxu0 0.0
        %957 = vmatprep.subr.mxu0 0.0
        %958 = vmatpush1.msra.mxu0 0.0
        %959 = vmatprep.subr.mxu0 0.0
        %960 = vmatpush1.msra.mxu0 0.0
        %961 = vmatprep.subr.mxu0 0.0
        %962 = vmatpush1.msra.mxu0 0.0
        %963 = vmatprep.subr.mxu0 0.0
        %964 = vmatpush1.msra.mxu0 0.0
        %965 = vmatprep.subr.mxu0 0.0
        %966 = vmatpush1.msra.mxu0 0.0
        %967 = vmatprep.subr.mxu0 0.0
        %968 = vmatpush1.msra.mxu0 0.0
        %969 = vmatprep.mubr.f32.mxu0 0.0
        %970 = vmatmul.mubr.f32.gmra.mrb[0].mxu0 %v471
        %v971 = vpop.f32.mrb[0].mxu0
        %v972 = vadd.f32 %v887, %v971
        %v973 = vpop.f32.mrb[0].mxu0
        %974 = vmatprep.mubr.f32.mxu0 0.0
        %975 = vmatmul.mubr.f32.gmra.mrb[0].mxu0 %v472
        %v976 = vpop.f32.mrb[0].mxu0
        %v977 = vadd.f32 %v892, %v976
        %v978 = vpop.f32.mrb[0].mxu0
        %979 = vmatprep.mubr.f32.mxu0 0.0
        %980 = vmatmul.mubr.f32.gmra.mrb[0].mxu0 %v473
        %v981 = vpop.f32.mrb[0].mxu0
        %v982 = vadd.f32 %v897, %v981
        %v983 = vpop.f32.mrb[0].mxu0
        %984 = vmatprep.mubr.f32.mxu0 0.0
        %985 = vmatmul.mubr.f32.gmra.mrb[0].mxu0 %v474
        %v986 = vpop.f32.mrb[0].mxu0
        %v987 = vadd.f32 %v902, %v986
        %v988 = vpop.f32.mrb[0].mxu0
        %989 = vdwg.mxu0
        %s990 = scalar_lea.vmem [#allocation8], 256
        %v991 = vld [vmem:[%s990] sm:$0xff]
        %v992 = vld [vmem:[%s990 + $0x8] sm:$0xff]
        %v993 = vld [vmem:[%s990 + $0x10] sm:$0xff]
        %v994 = vld [vmem:[%s990 + $0x18] sm:$0xff]
        %v995 = vld [vmem:[%s990 + $0x20] sm:$0xff]
        %v996 = vld [vmem:[%s990 + $0x28] sm:$0xff]
        %v997 = vld [vmem:[%s990 + $0x30] sm:$0xff]
        %v998 = vld [vmem:[%s990 + $0x38] sm:$0xff]
        %v999 = vld [vmem:[%s990 + $0x40] sm:$0xff]
        %v1000 = vld [vmem:[%s990 + $0x48] sm:$0xff]
        %v1001 = vld [vmem:[%s990 + $0x50] sm:$0xff]
        %v1002 = vld [vmem:[%s990 + $0x58] sm:$0xff]
        %v1003 = vld [vmem:[%s990 + $0x60] sm:$0xff]
        %v1004 = vld [vmem:[%s990 + $0x68] sm:$0xff]
        %v1005 = vld [vmem:[%s990 + $0x70] sm:$0xff]
        %v1006 = vld [vmem:[%s990 + $0x78] sm:$0xff]
        %s1007 = scalar_lea.vmem [#allocation10], 128
        %v1008 = vld [vmem:[%s1007] sm:$0xff]
        %v1009 = vld [vmem:[%s1007 + $0x8] sm:$0xff]
        %v1010 = vld [vmem:[%s1007 + $0x10] sm:$0xff]
        %v1011 = vld [vmem:[%s1007 + $0x18] sm:$0xff]
        %v1012 = vld [vmem:[%s1007 + $0x20] sm:$0xff]
        %v1013 = vld [vmem:[%s1007 + $0x28] sm:$0xff]
        %v1014 = vld [vmem:[%s1007 + $0x30] sm:$0xff]
        %v1015 = vld [vmem:[%s1007 + $0x38] sm:$0xff]
        %1016 = vmatprep.subr.mxu0 0.0
        %1017 = vmatpush1.msra.mxu0 %v1008
        %1018 = vmatprep.subr.mxu0 0.0
        %1019 = vmatpush1.msra.mxu0 %v1009
        %1020 = vmatprep.subr.mxu0 0.0
        %1021 = vmatpush1.msra.mxu0 %v1010
        %1022 = vmatprep.subr.mxu0 0.0
        %1023 = vmatpush1.msra.mxu0 %v1011
        %1024 = vmatprep.subr.mxu0 0.0
        %1025 = vmatpush1.msra.mxu0 %v1012
        %1026 = vmatprep.subr.mxu0 0.0
        %1027 = vmatpush1.msra.mxu0 %v1013
        %1028 = vmatprep.subr.mxu0 0.0
        %1029 = vmatpush1.msra.mxu0 %v1014
        %1030 = vmatprep.subr.mxu0 0.0
        %1031 = vmatpush1.msra.mxu0 %v1015
        %1032 = vmatprep.subr.mxu0 0.0
        %1033 = vmatpush1.msra.mxu0 0.0
        %1034 = vmatprep.subr.mxu0 0.0
        %1035 = vmatpush1.msra.mxu0 0.0
        %1036 = vmatprep.subr.mxu0 0.0
        %1037 = vmatpush1.msra.mxu0 0.0
        %1038 = vmatprep.subr.mxu0 0.0
        %1039 = vmatpush1.msra.mxu0 0.0
        %1040 = vmatprep.subr.mxu0 0.0
        %1041 = vmatpush1.msra.mxu0 0.0
        %1042 = vmatprep.subr.mxu0 0.0
        %1043 = vmatpush1.msra.mxu0 0.0
        %1044 = vmatprep.subr.mxu0 0.0
        %1045 = vmatpush1.msra.mxu0 0.0
        %1046 = vmatprep.subr.mxu0 0.0
        %1047 = vmatpush1.msra.mxu0 0.0
        %1048 = vmatprep.subr.mxu0 0.0
        %1049 = vmatpush1.msra.mxu0 0.0
        %1050 = vmatprep.subr.mxu0 0.0
        %1051 = vmatpush1.msra.mxu0 0.0
        %1052 = vmatprep.subr.mxu0 0.0
        %1053 = vmatpush1.msra.mxu0 0.0
        %1054 = vmatprep.subr.mxu0 0.0
        %1055 = vmatpush1.msra.mxu0 0.0
        %1056 = vmatprep.subr.mxu0 0.0
        %1057 = vmatpush1.msra.mxu0 0.0
        %1058 = vmatprep.subr.mxu0 0.0
        %1059 = vmatpush1.msra.mxu0 0.0
        %1060 = vmatprep.subr.mxu0 0.0
        %1061 = vmatpush1.msra.mxu0 0.0
        %1062 = vmatprep.subr.mxu0 0.0
        %1063 = vmatpush1.msra.mxu0 0.0
        %1064 = vmatprep.subr.mxu0 0.0
        %1065 = vmatpush1.msra.mxu0 0.0
        %1066 = vmatprep.subr.mxu0 0.0
        %1067 = vmatpush1.msra.mxu0 0.0
        %1068 = vmatprep.subr.mxu0 0.0
        %1069 = vmatpush1.msra.mxu0 0.0
        %1070 = vmatprep.subr.mxu0 0.0
        %1071 = vmatpush1.msra.mxu0 0.0
        %1072 = vmatprep.subr.mxu0 0.0
        %1073 = vmatpush1.msra.mxu0 0.0
        %1074 = vmatprep.subr.mxu0 0.0
        %1075 = vmatpush1.msra.mxu0 0.0
        %1076 = vmatprep.subr.mxu0 0.0
        %1077 = vmatpush1.msra.mxu0 0.0
        %1078 = vmatprep.subr.mxu0 0.0
        %1079 = vmatpush1.msra.mxu0 0.0
        %1080 = vmatprep.mubr.f32.mxu0 0.0
        %1081 = vmatmul.mubr.f32.gmra.mrb[0].mxu0 %v613
        %v1082 = vpop.f32.mrb[0].mxu0
        %v1083 = vadd.f32 0.0, %v1082
        %v1084 = vpop.f32.mrb[0].mxu0
        %1085 = vmatprep.mubr.f32.mxu0 0.0
        %1086 = vmatmul.mubr.f32.gmra.mrb[0].mxu0 %v616
        %v1087 = vpop.f32.mrb[0].mxu0
        %v1088 = vadd.f32 0.0, %v1087
        %v1089 = vpop.f32.mrb[0].mxu0
        %1090 = vmatprep.mubr.f32.mxu0 0.0
        %1091 = vmatmul.mubr.f32.gmra.mrb[0].mxu0 %v619
        %v1092 = vpop.f32.mrb[0].mxu0
        %v1093 = vadd.f32 0.0, %v1092
        %v1094 = vpop.f32.mrb[0].mxu0
        %1095 = vmatprep.mubr.f32.mxu0 0.0
        %1096 = vmatmul.mubr.f32.gmra.mrb[0].mxu0 %v622
        %v1097 = vpop.f32.mrb[0].mxu0
        %v1098 = vadd.f32 0.0, %v1097
        %v1099 = vpop.f32.mrb[0].mxu0
        %1100 = vdwg.mxu0
        %1101 = vmatprep.subr.mxu0 0.0
        %1102 = vmatpush1.msra.mxu0 %v991
        %1103 = vmatprep.subr.mxu0 0.0
        %1104 = vmatpush1.msra.mxu0 %v992
        %1105 = vmatprep.subr.mxu0 0.0
        %1106 = vmatpush1.msra.mxu0 %v993
        %1107 = vmatprep.subr.mxu0 0.0
        %1108 = vmatpush1.msra.mxu0 %v994
        %1109 = vmatprep.subr.mxu0 0.0
        %1110 = vmatpush1.msra.mxu0 %v995
        %1111 = vmatprep.subr.mxu0 0.0
        %1112 = vmatpush1.msra.mxu0 %v996
        %1113 = vmatprep.subr.mxu0 0.0
        %1114 = vmatpush1.msra.mxu0 %v997
        %1115 = vmatprep.subr.mxu0 0.0
        %1116 = vmatpush1.msra.mxu0 %v998
        %1117 = vmatprep.subr.mxu0 0.0
        %1118 = vmatpush1.msra.mxu0 %v999
        %1119 = vmatprep.subr.mxu0 0.0
        %1120 = vmatpush1.msra.mxu0 %v1000
        %1121 = vmatprep.subr.mxu0 0.0
        %1122 = vmatpush1.msra.mxu0 %v1001
        %1123 = vmatprep.subr.mxu0 0.0
        %1124 = vmatpush1.msra.mxu0 %v1002
        %1125 = vmatprep.subr.mxu0 0.0
        %1126 = vmatpush1.msra.mxu0 %v1003
        %1127 = vmatprep.subr.mxu0 0.0
        %1128 = vmatpush1.msra.mxu0 %v1004
        %1129 = vmatprep.subr.mxu0 0.0
        %1130 = vmatpush1.msra.mxu0 %v1005
        %1131 = vmatprep.subr.mxu0 0.0
        %1132 = vmatpush1.msra.mxu0 %v1006
        %1133 = vmatprep.subr.mxu0 0.0
        %1134 = vmatpush1.msra.mxu0 0.0
        %1135 = vmatprep.subr.mxu0 0.0
        %1136 = vmatpush1.msra.mxu0 0.0
        %1137 = vmatprep.subr.mxu0 0.0
        %1138 = vmatpush1.msra.mxu0 0.0
        %1139 = vmatprep.subr.mxu0 0.0
        %1140 = vmatpush1.msra.mxu0 0.0
        %1141 = vmatprep.subr.mxu0 0.0
        %1142 = vmatpush1.msra.mxu0 0.0
        %1143 = vmatprep.subr.mxu0 0.0
        %1144 = vmatpush1.msra.mxu0 0.0
        %1145 = vmatprep.subr.mxu0 0.0
        %1146 = vmatpush1.msra.mxu0 0.0
        %1147 = vmatprep.subr.mxu0 0.0
        %1148 = vmatpush1.msra.mxu0 0.0
        %1149 = vmatprep.subr.mxu0 0.0
        %1150 = vmatpush1.msra.mxu0 0.0
        %1151 = vmatprep.subr.mxu0 0.0
        %1152 = vmatpush1.msra.mxu0 0.0
        %1153 = vmatprep.subr.mxu0 0.0
        %1154 = vmatpush1.msra.mxu0 0.0
        %1155 = vmatprep.subr.mxu0 0.0
        %1156 = vmatpush1.msra.mxu0 0.0
        %1157 = vmatprep.subr.mxu0 0.0
        %1158 = vmatpush1.msra.mxu0 0.0
        %1159 = vmatprep.subr.mxu0 0.0
        %1160 = vmatpush1.msra.mxu0 0.0
        %1161 = vmatprep.subr.mxu0 0.0
        %1162 = vmatpush1.msra.mxu0 0.0
        %1163 = vmatprep.subr.mxu0 0.0
        %1164 = vmatpush1.msra.mxu0 0.0
        %1165 = vmatprep.mubr.f32.mxu0 0.0
        %1166 = vmatmul.mubr.f32.gmra.mrb[0].mxu0 %v471
        %v1167 = vpop.f32.mrb[0].mxu0
        %v1168 = vadd.f32 %v1083, %v1167
        %v1169 = vpop.f32.mrb[0].mxu0
        %1170 = vmatprep.mubr.f32.mxu0 0.0
        %1171 = vmatmul.mubr.f32.gmra.mrb[0].mxu0 %v472
        %v1172 = vpop.f32.mrb[0].mxu0
        %v1173 = vadd.f32 %v1088, %v1172
        %v1174 = vpop.f32.mrb[0].mxu0
        %1175 = vmatprep.mubr.f32.mxu0 0.0
        %1176 = vmatmul.mubr.f32.gmra.mrb[0].mxu0 %v473
        %v1177 = vpop.f32.mrb[0].mxu0
        %v1178 = vadd.f32 %v1093, %v1177
        %v1179 = vpop.f32.mrb[0].mxu0
        %1180 = vmatprep.mubr.f32.mxu0 0.0
        %1181 = vmatmul.mubr.f32.gmra.mrb[0].mxu0 %v474
        %v1182 = vpop.f32.mrb[0].mxu0
        %v1183 = vadd.f32 %v1098, %v1182
        %v1184 = vpop.f32.mrb[0].mxu0
        %1185 = vdwg.mxu0
        %vm1186 = vcmask 261120
        %v1188 = vsel %vm1186, %v475, 0
        %v1191 = vsel %vm1186, %v476, 0
        %v1194 = vsel %vm1186, %v477, 0
        %v1197 = vsel %vm1186, %v478, 0
        %1199 = vmatprep.subr.mxu0 0.0
        %1200 = vmatpush1.msra.mxu0 %v776
        %1201 = vmatprep.subr.mxu0 0.0
        %1202 = vmatpush1.msra.mxu0 %v781
        %1203 = vmatprep.subr.mxu0 0.0
        %1204 = vmatpush1.msra.mxu0 %v786
        %1205 = vmatprep.subr.mxu0 0.0
        %1206 = vmatpush1.msra.mxu0 %v791
        %1207 = vmatprep.subr.mxu0 0.0
        %1208 = vmatpush1.msra.mxu0 0.0
        %1209 = vmatprep.subr.mxu0 0.0
        %1210 = vmatpush1.msra.mxu0 0.0
        %1211 = vmatprep.subr.mxu0 0.0
        %1212 = vmatpush1.msra.mxu0 0.0
        %1213 = vmatprep.subr.mxu0 0.0
        %1214 = vmatpush1.msra.mxu0 0.0
        %1215 = vmatprep.subr.mxu0 0.0
        %1216 = vmatpush1.msra.mxu0 0.0
        %1217 = vmatprep.subr.mxu0 0.0
        %1218 = vmatpush1.msra.mxu0 0.0
        %1219 = vmatprep.subr.mxu0 0.0
        %1220 = vmatpush1.msra.mxu0 0.0
        %1221 = vmatprep.subr.mxu0 0.0
        %1222 = vmatpush1.msra.mxu0 0.0
        %1223 = vmatprep.subr.mxu0 0.0
        %1224 = vmatpush1.msra.mxu0 0.0
        %1225 = vmatprep.subr.mxu0 0.0
        %1226 = vmatpush1.msra.mxu0 0.0
        %1227 = vmatprep.subr.mxu0 0.0
        %1228 = vmatpush1.msra.mxu0 0.0
        %1229 = vmatprep.subr.mxu0 0.0
        %1230 = vmatpush1.msra.mxu0 0.0
        %1231 = vmatprep.subr.mxu0 0.0
        %1232 = vmatpush1.msra.mxu0 0.0
        %1233 = vmatprep.subr.mxu0 0.0
        %1234 = vmatpush1.msra.mxu0 0.0
        %1235 = vmatprep.subr.mxu0 0.0
        %1236 = vmatpush1.msra.mxu0 0.0
        %1237 = vmatprep.subr.mxu0 0.0
        %1238 = vmatpush1.msra.mxu0 0.0
        %1239 = vmatprep.subr.mxu0 0.0
        %1240 = vmatpush1.msra.mxu0 0.0
        %1241 = vmatprep.subr.mxu0 0.0
        %1242 = vmatpush1.msra.mxu0 0.0
        %1243 = vmatprep.subr.mxu0 0.0
        %1244 = vmatpush1.msra.mxu0 0.0
        %1245 = vmatprep.subr.mxu0 0.0
        %1246 = vmatpush1.msra.mxu0 0.0
        %1247 = vmatprep.subr.mxu0 0.0
        %1248 = vmatpush1.msra.mxu0 0.0
        %1249 = vmatprep.subr.mxu0 0.0
        %1250 = vmatpush1.msra.mxu0 0.0
        %1251 = vmatprep.subr.mxu0 0.0
        %1252 = vmatpush1.msra.mxu0 0.0
        %1253 = vmatprep.subr.mxu0 0.0
        %1254 = vmatpush1.msra.mxu0 0.0
        %1255 = vmatprep.subr.mxu0 0.0
        %1256 = vmatpush1.msra.mxu0 0.0
        %1257 = vmatprep.subr.mxu0 0.0
        %1258 = vmatpush1.msra.mxu0 0.0
        %1259 = vmatprep.subr.mxu0 0.0
        %1260 = vmatpush1.msra.mxu0 0.0
        %1261 = vmatprep.subr.mxu0 0.0
        %1262 = vmatpush1.msra.mxu0 0.0
        %1263 = vmatprep.mubr.f32.mxu0 0.0
        %1264 = vmatmul.mubr.f32.gmra.mrb[0].mxu0 %v1188
        %v1265 = vpop.f32.mrb[0].mxu0
        %v1266 = vadd.f32 %v972, %v1265
        %v1267 = vpop.f32.mrb[0].mxu0
        %1268 = vmatprep.mubr.f32.mxu0 0.0
        %1269 = vmatmul.mubr.f32.gmra.mrb[0].mxu0 %v1191
        %v1270 = vpop.f32.mrb[0].mxu0
        %v1271 = vadd.f32 %v977, %v1270
        %v1272 = vpop.f32.mrb[0].mxu0
        %1273 = vmatprep.mubr.f32.mxu0 0.0
        %1274 = vmatmul.mubr.f32.gmra.mrb[0].mxu0 %v1194
        %v1275 = vpop.f32.mrb[0].mxu0
        %v1276 = vadd.f32 %v982, %v1275
        %v1277 = vpop.f32.mrb[0].mxu0
        %1278 = vmatprep.mubr.f32.mxu0 0.0
        %1279 = vmatmul.mubr.f32.gmra.mrb[0].mxu0 %v1197
        %v1280 = vpop.f32.mrb[0].mxu0
        %v1281 = vadd.f32 %v987, %v1280
        %v1282 = vpop.f32.mrb[0].mxu0
        %1283 = vdwg.mxu0
        %v1285 = vsel %vm1186, %v479, 0
        %v1288 = vsel %vm1186, %v480, 0
        %v1291 = vsel %vm1186, %v481, 0
        %v1294 = vsel %vm1186, %v482, 0
        %1296 = vmatprep.subr.mxu0 0.0
        %1297 = vmatpush1.msra.mxu0 %v1168
        %1298 = vmatprep.subr.mxu0 0.0
        %1299 = vmatpush1.msra.mxu0 %v1173
        %1300 = vmatprep.subr.mxu0 0.0
        %1301 = vmatpush1.msra.mxu0 %v1178
        %1302 = vmatprep.subr.mxu0 0.0
        %1303 = vmatpush1.msra.mxu0 %v1183
        %1304 = vmatprep.subr.mxu0 0.0
        %1305 = vmatpush1.msra.mxu0 0.0
        %1306 = vmatprep.subr.mxu0 0.0
        %1307 = vmatpush1.msra.mxu0 0.0
        %1308 = vmatprep.subr.mxu0 0.0
        %1309 = vmatpush1.msra.mxu0 0.0
        %1310 = vmatprep.subr.mxu0 0.0
        %1311 = vmatpush1.msra.mxu0 0.0
        %1312 = vmatprep.subr.mxu0 0.0
        %1313 = vmatpush1.msra.mxu0 0.0
        %1314 = vmatprep.subr.mxu0 0.0
        %1315 = vmatpush1.msra.mxu0 0.0
        %1316 = vmatprep.subr.mxu0 0.0
        %1317 = vmatpush1.msra.mxu0 0.0
        %1318 = vmatprep.subr.mxu0 0.0
        %1319 = vmatpush1.msra.mxu0 0.0
        %1320 = vmatprep.subr.mxu0 0.0
        %1321 = vmatpush1.msra.mxu0 0.0
        %1322 = vmatprep.subr.mxu0 0.0
        %1323 = vmatpush1.msra.mxu0 0.0
        %1324 = vmatprep.subr.mxu0 0.0
        %1325 = vmatpush1.msra.mxu0 0.0
        %1326 = vmatprep.subr.mxu0 0.0
        %1327 = vmatpush1.msra.mxu0 0.0
        %1328 = vmatprep.subr.mxu0 0.0
        %1329 = vmatpush1.msra.mxu0 0.0
        %1330 = vmatprep.subr.mxu0 0.0
        %1331 = vmatpush1.msra.mxu0 0.0
        %1332 = vmatprep.subr.mxu0 0.0
        %1333 = vmatpush1.msra.mxu0 0.0
        %1334 = vmatprep.subr.mxu0 0.0
        %1335 = vmatpush1.msra.mxu0 0.0
        %1336 = vmatprep.subr.mxu0 0.0
        %1337 = vmatpush1.msra.mxu0 0.0
        %1338 = vmatprep.subr.mxu0 0.0
        %1339 = vmatpush1.msra.mxu0 0.0
        %1340 = vmatprep.subr.mxu0 0.0
        %1341 = vmatpush1.msra.mxu0 0.0
        %1342 = vmatprep.subr.mxu0 0.0
        %1343 = vmatpush1.msra.mxu0 0.0
        %1344 = vmatprep.subr.mxu0 0.0
        %1345 = vmatpush1.msra.mxu0 0.0
        %1346 = vmatprep.subr.mxu0 0.0
        %1347 = vmatpush1.msra.mxu0 0.0
        %1348 = vmatprep.subr.mxu0 0.0
        %1349 = vmatpush1.msra.mxu0 0.0
        %1350 = vmatprep.subr.mxu0 0.0
        %1351 = vmatpush1.msra.mxu0 0.0
        %1352 = vmatprep.subr.mxu0 0.0
        %1353 = vmatpush1.msra.mxu0 0.0
        %1354 = vmatprep.subr.mxu0 0.0
        %1355 = vmatpush1.msra.mxu0 0.0
        %1356 = vmatprep.subr.mxu0 0.0
        %1357 = vmatpush1.msra.mxu0 0.0
        %1358 = vmatprep.subr.mxu0 0.0
        %1359 = vmatpush1.msra.mxu0 0.0
        %1360 = vmatprep.mubr.f32.mxu0 0.0
        %1361 = vmatmul.mubr.f32.gmra.mrb[0].mxu0 %v1285
        %v1362 = vpop.f32.mrb[0].mxu0
        %v1363 = vadd.f32 0.0, %v1362
        %v1364 = vpop.f32.mrb[0].mxu0
        %1365 = vmatprep.mubr.f32.mxu0 0.0
        %1366 = vmatmul.mubr.f32.gmra.mrb[0].mxu0 %v1288
        %v1367 = vpop.f32.mrb[0].mxu0
        %v1368 = vadd.f32 0.0, %v1367
        %v1369 = vpop.f32.mrb[0].mxu0
        %1370 = vmatprep.mubr.f32.mxu0 0.0
        %1371 = vmatmul.mubr.f32.gmra.mrb[0].mxu0 %v1291
        %v1372 = vpop.f32.mrb[0].mxu0
        %v1373 = vadd.f32 0.0, %v1372
        %v1374 = vpop.f32.mrb[0].mxu0
        %1375 = vmatprep.mubr.f32.mxu0 0.0
        %1376 = vmatmul.mubr.f32.gmra.mrb[0].mxu0 %v1294
        %v1377 = vpop.f32.mrb[0].mxu0
        %v1378 = vadd.f32 0.0, %v1377
        %v1379 = vpop.f32.mrb[0].mxu0
        %1380 = vdwg.mxu0
        %v1381 = vadd.f32 %v1266, %v1363
        %v1382 = vadd.f32 %v1271, %v1368
        %v1383 = vadd.f32 %v1276, %v1373
        %v1384 = vadd.f32 %v1281, %v1378
        %v1385 = vld [vmem:[%s7] sm:$0x1]
        %v1387 = vlaneseq
        %v1388 = vshrl.u32 %v1387, 7
        %v1389 = vsub.s32 0, %v1388
        %v1390 = vrot.slane %v1385, %v1389
        %v1392 = vadd.f32 %v1381, %v1390
        %v1393 = vadd.f32 %v1382, %v1390
        %v1394 = vadd.f32 %v1383, %v1390
        %v1395 = vadd.f32 %v1384, %v1390
        %v1396 = vmax.f32 %v1392, 0.0
        %v1397 = vmax.f32 %v1393, 0.0
        %v1398 = vmax.f32 %v1394, 0.0
        %v1399 = vmax.f32 %v1395, 0.0
        %v1400 = vld [vmem:[#allocation11] sm:$0xff]
        %v1401 = vld [vmem:[#allocation11 + $0x8] sm:$0xff]
        %v1402 = vld [vmem:[#allocation11 + $0x10] sm:$0xff]
        %v1403 = vld [vmem:[#allocation11 + $0x18] sm:$0xff]
        %v1404 = vld [vmem:[#allocation11 + $0x20] sm:$0xff]
        %v1405 = vld [vmem:[#allocation11 + $0x28] sm:$0xff]
        %v1406 = vld [vmem:[#allocation11 + $0x30] sm:$0xff]
        %v1407 = vld [vmem:[#allocation11 + $0x38] sm:$0xff]
        %v1408 = vld [vmem:[#allocation11 + $0x40] sm:$0xff]
        %v1409 = vld [vmem:[#allocation11 + $0x48] sm:$0xff]
        %v1410 = vld [vmem:[#allocation11 + $0x50] sm:$0xff]
        %v1411 = vld [vmem:[#allocation11 + $0x58] sm:$0xff]
        %v1412 = vld [vmem:[#allocation11 + $0x60] sm:$0xff]
        %v1413 = vld [vmem:[#allocation11 + $0x68] sm:$0xff]
        %v1414 = vld [vmem:[#allocation11 + $0x70] sm:$0xff]
        %v1415 = vld [vmem:[#allocation11 + $0x78] sm:$0xff]
        %v1416 = vld [vmem:[#allocation11 + $0x80] sm:$0xff]
        %v1417 = vld [vmem:[#allocation11 + $0x88] sm:$0xff]
        %v1418 = vld [vmem:[#allocation11 + $0x90] sm:$0xff]
        %v1419 = vld [vmem:[#allocation11 + $0x98] sm:$0xff]
        %v1420 = vld [vmem:[#allocation11 + $0xa0] sm:$0xff]
        %v1421 = vld [vmem:[#allocation11 + $0xa8] sm:$0xff]
        %v1422 = vld [vmem:[#allocation11 + $0xb0] sm:$0xff]
        %v1423 = vld [vmem:[#allocation11 + $0xb8] sm:$0xff]
        %v1424 = vld [vmem:[#allocation11 + $0xc0] sm:$0xff]
        %v1425 = vld [vmem:[#allocation11 + $0xc8] sm:$0xff]
        %v1426 = vld [vmem:[#allocation11 + $0xd0] sm:$0xff]
        %v1427 = vld [vmem:[#allocation11 + $0xd8] sm:$0xff]
        %v1428 = vld [vmem:[#allocation11 + $0xe0] sm:$0xff]
        %v1429 = vld [vmem:[#allocation11 + $0xe8] sm:$0xff]
        %v1430 = vld [vmem:[#allocation11 + $0xf0] sm:$0xff]
        %v1431 = vld [vmem:[#allocation11 + $0xf8] sm:$0xff]
        %1432 = vmatprep.subr.mxu0 %v1401
        %1433 = vmatpush1.msra.mxu0 %v1400
        %1434 = vmatprep.subr.mxu0 %v1403
        %1435 = vmatpush1.msra.mxu0 %v1402
        %1436 = vmatprep.subr.mxu0 %v1405
        %1437 = vmatpush1.msra.mxu0 %v1404
        %1438 = vmatprep.subr.mxu0 %v1407
        %1439 = vmatpush1.msra.mxu0 %v1406
        %1440 = vmatprep.subr.mxu0 %v1409
        %1441 = vmatpush1.msra.mxu0 %v1408
        %1442 = vmatprep.subr.mxu0 %v1411
        %1443 = vmatpush1.msra.mxu0 %v1410
        %1444 = vmatprep.subr.mxu0 %v1413
        %1445 = vmatpush1.msra.mxu0 %v1412
        %1446 = vmatprep.subr.mxu0 %v1415
        %1447 = vmatpush1.msra.mxu0 %v1414
        %1448 = vmatprep.subr.mxu0 %v1417
        %1449 = vmatpush1.msra.mxu0 %v1416
        %1450 = vmatprep.subr.mxu0 %v1419
        %1451 = vmatpush1.msra.mxu0 %v1418
        %1452 = vmatprep.subr.mxu0 %v1421
        %1453 = vmatpush1.msra.mxu0 %v1420
        %1454 = vmatprep.subr.mxu0 %v1423
        %1455 = vmatpush1.msra.mxu0 %v1422
        %1456 = vmatprep.subr.mxu0 %v1425
        %1457 = vmatpush1.msra.mxu0 %v1424
        %1458 = vmatprep.subr.mxu0 %v1427
        %1459 = vmatpush1.msra.mxu0 %v1426
        %1460 = vmatprep.subr.mxu0 %v1429
        %1461 = vmatpush1.msra.mxu0 %v1428
        %1462 = vmatprep.subr.mxu0 %v1431
        %1463 = vmatpush1.msra.mxu0 %v1430
        %1464 = vmatprep.subr.mxu0 0.0
        %1465 = vmatpush1.msra.mxu0 0.0
        %1466 = vmatprep.subr.mxu0 0.0
        %1467 = vmatpush1.msra.mxu0 0.0
        %1468 = vmatprep.subr.mxu0 0.0
        %1469 = vmatpush1.msra.mxu0 0.0
        %1470 = vmatprep.subr.mxu0 0.0
        %1471 = vmatpush1.msra.mxu0 0.0
        %1472 = vmatprep.subr.mxu0 0.0
        %1473 = vmatpush1.msra.mxu0 0.0
        %1474 = vmatprep.subr.mxu0 0.0
        %1475 = vmatpush1.msra.mxu0 0.0
        %1476 = vmatprep.subr.mxu0 0.0
        %1477 = vmatpush1.msra.mxu0 0.0
        %1478 = vmatprep.subr.mxu0 0.0
        %1479 = vmatpush1.msra.mxu0 0.0
        %1480 = vmatprep.subr.mxu0 0.0
        %1481 = vmatpush1.msra.mxu0 0.0
        %1482 = vmatprep.subr.mxu0 0.0
        %1483 = vmatpush1.msra.mxu0 0.0
        %1484 = vmatprep.subr.mxu0 0.0
        %1485 = vmatpush1.msra.mxu0 0.0
        %1486 = vmatprep.subr.mxu0 0.0
        %1487 = vmatpush1.msra.mxu0 0.0
        %1488 = vmatprep.subr.mxu0 0.0
        %1489 = vmatpush1.msra.mxu0 0.0
        %1490 = vmatprep.subr.mxu0 0.0
        %1491 = vmatpush1.msra.mxu0 0.0
        %1492 = vmatprep.subr.mxu0 0.0
        %1493 = vmatpush1.msra.mxu0 0.0
        %1494 = vmatprep.subr.mxu0 0.0
        %1495 = vmatpush1.msra.mxu0 0.0
        %1496 = vmatprep.mubr.f32.mxu0 0.0
        %1497 = vmatmul.mubr.f32.gmra.mrb[0].mxu0 %v1396
        %v1498 = vpop.f32.mrb[0].mxu0
        %v1499 = vadd.f32 0.0, %v1498
        %v1500 = vpop.f32.mrb[0].mxu0
        %v1501 = vadd.f32 0.0, %v1500
        %1502 = vmatprep.mubr.f32.mxu0 0.0
        %1503 = vmatmul.mubr.f32.gmra.mrb[0].mxu0 %v1397
        %v1504 = vpop.f32.mrb[0].mxu0
        %v1505 = vadd.f32 0.0, %v1504
        %v1506 = vpop.f32.mrb[0].mxu0
        %v1507 = vadd.f32 0.0, %v1506
        %1508 = vmatprep.mubr.f32.mxu0 0.0
        %1509 = vmatmul.mubr.f32.gmra.mrb[0].mxu0 %v1398
        %v1510 = vpop.f32.mrb[0].mxu0
        %v1511 = vadd.f32 0.0, %v1510
        %v1512 = vpop.f32.mrb[0].mxu0
        %v1513 = vadd.f32 0.0, %v1512
        %1514 = vmatprep.mubr.f32.mxu0 0.0
        %1515 = vmatmul.mubr.f32.gmra.mrb[0].mxu0 %v1399
        %v1516 = vpop.f32.mrb[0].mxu0
        %v1517 = vadd.f32 0.0, %v1516
        %v1518 = vpop.f32.mrb[0].mxu0
        %v1519 = vadd.f32 0.0, %v1518
        %1520 = vdwg.mxu0
        %s1521 = scalar_lea.vmem [#allocation11], 256
        %v1522 = vld [vmem:[%s1521] sm:$0xff]
        %v1523 = vld [vmem:[%s1521 + $0x8] sm:$0xff]
        %v1524 = vld [vmem:[%s1521 + $0x10] sm:$0xff]
        %v1525 = vld [vmem:[%s1521 + $0x18] sm:$0xff]
        %v1526 = vld [vmem:[%s1521 + $0x20] sm:$0xff]
        %v1527 = vld [vmem:[%s1521 + $0x28] sm:$0xff]
        %v1528 = vld [vmem:[%s1521 + $0x30] sm:$0xff]
        %v1529 = vld [vmem:[%s1521 + $0x38] sm:$0xff]
        %v1530 = vld [vmem:[%s1521 + $0x40] sm:$0xff]
        %v1531 = vld [vmem:[%s1521 + $0x48] sm:$0xff]
        %v1532 = vld [vmem:[%s1521 + $0x50] sm:$0xff]
        %v1533 = vld [vmem:[%s1521 + $0x58] sm:$0xff]
        %v1534 = vld [vmem:[%s1521 + $0x60] sm:$0xff]
        %v1535 = vld [vmem:[%s1521 + $0x68] sm:$0xff]
        %v1536 = vld [vmem:[%s1521 + $0x70] sm:$0xff]
        %v1537 = vld [vmem:[%s1521 + $0x78] sm:$0xff]
        %v1538 = vld [vmem:[%s1521 + $0x80] sm:$0xff]
        %v1539 = vld [vmem:[%s1521 + $0x88] sm:$0xff]
        %v1540 = vld [vmem:[%s1521 + $0x90] sm:$0xff]
        %v1541 = vld [vmem:[%s1521 + $0x98] sm:$0xff]
        %v1542 = vld [vmem:[%s1521 + $0xa0] sm:$0xff]
        %v1543 = vld [vmem:[%s1521 + $0xa8] sm:$0xff]
        %v1544 = vld [vmem:[%s1521 + $0xb0] sm:$0xff]
        %v1545 = vld [vmem:[%s1521 + $0xb8] sm:$0xff]
        %v1546 = vld [vmem:[%s1521 + $0xc0] sm:$0xff]
        %v1547 = vld [vmem:[%s1521 + $0xc8] sm:$0xff]
        %v1548 = vld [vmem:[%s1521 + $0xd0] sm:$0xff]
        %v1549 = vld [vmem:[%s1521 + $0xd8] sm:$0xff]
        %v1550 = vld [vmem:[%s1521 + $0xe0] sm:$0xff]
        %v1551 = vld [vmem:[%s1521 + $0xe8] sm:$0xff]
        %v1552 = vld [vmem:[%s1521 + $0xf0] sm:$0xff]
        %v1553 = vld [vmem:[%s1521 + $0xf8] sm:$0xff]
        %1554 = vmatprep.subr.mxu0 %v1523
        %1555 = vmatpush1.msra.mxu0 %v1522
        %1556 = vmatprep.subr.mxu0 %v1525
        %1557 = vmatpush1.msra.mxu0 %v1524
        %1558 = vmatprep.subr.mxu0 %v1527
        %1559 = vmatpush1.msra.mxu0 %v1526
        %1560 = vmatprep.subr.mxu0 %v1529
        %1561 = vmatpush1.msra.mxu0 %v1528
        %1562 = vmatprep.subr.mxu0 %v1531
        %1563 = vmatpush1.msra.mxu0 %v1530
        %1564 = vmatprep.subr.mxu0 %v1533
        %1565 = vmatpush1.msra.mxu0 %v1532
        %1566 = vmatprep.subr.mxu0 %v1535
        %1567 = vmatpush1.msra.mxu0 %v1534
        %1568 = vmatprep.subr.mxu0 %v1537
        %1569 = vmatpush1.msra.mxu0 %v1536
        %1570 = vmatprep.subr.mxu0 %v1539
        %1571 = vmatpush1.msra.mxu0 %v1538
        %1572 = vmatprep.subr.mxu0 %v1541
        %1573 = vmatpush1.msra.mxu0 %v1540
        %1574 = vmatprep.subr.mxu0 %v1543
        %1575 = vmatpush1.msra.mxu0 %v1542
        %1576 = vmatprep.subr.mxu0 %v1545
        %1577 = vmatpush1.msra.mxu0 %v1544
        %1578 = vmatprep.subr.mxu0 %v1547
        %1579 = vmatpush1.msra.mxu0 %v1546
        %1580 = vmatprep.subr.mxu0 %v1549
        %1581 = vmatpush1.msra.mxu0 %v1548
        %1582 = vmatprep.subr.mxu0 %v1551
        %1583 = vmatpush1.msra.mxu0 %v1550
        %1584 = vmatprep.subr.mxu0 %v1553
        %1585 = vmatpush1.msra.mxu0 %v1552
        %1586 = vmatprep.subr.mxu0 0.0
        %1587 = vmatpush1.msra.mxu0 0.0
        %1588 = vmatprep.subr.mxu0 0.0
        %1589 = vmatpush1.msra.mxu0 0.0
        %1590 = vmatprep.subr.mxu0 0.0
        %1591 = vmatpush1.msra.mxu0 0.0
        %1592 = vmatprep.subr.mxu0 0.0
        %1593 = vmatpush1.msra.mxu0 0.0
        %1594 = vmatprep.subr.mxu0 0.0
        %1595 = vmatpush1.msra.mxu0 0.0
        %1596 = vmatprep.subr.mxu0 0.0
        %1597 = vmatpush1.msra.mxu0 0.0
        %1598 = vmatprep.subr.mxu0 0.0
        %1599 = vmatpush1.msra.mxu0 0.0
        %1600 = vmatprep.subr.mxu0 0.0
        %1601 = vmatpush1.msra.mxu0 0.0
        %1602 = vmatprep.subr.mxu0 0.0
        %1603 = vmatpush1.msra.mxu0 0.0
        %1604 = vmatprep.subr.mxu0 0.0
        %1605 = vmatpush1.msra.mxu0 0.0
        %1606 = vmatprep.subr.mxu0 0.0
        %1607 = vmatpush1.msra.mxu0 0.0
        %1608 = vmatprep.subr.mxu0 0.0
        %1609 = vmatpush1.msra.mxu0 0.0
        %1610 = vmatprep.subr.mxu0 0.0
        %1611 = vmatpush1.msra.mxu0 0.0
        %1612 = vmatprep.subr.mxu0 0.0
        %1613 = vmatpush1.msra.mxu0 0.0
        %1614 = vmatprep.subr.mxu0 0.0
        %1615 = vmatpush1.msra.mxu0 0.0
        %1616 = vmatprep.subr.mxu0 0.0
        %1617 = vmatpush1.msra.mxu0 0.0
        %1618 = vmatprep.mubr.f32.mxu0 0.0
        %1619 = vmatmul.mubr.f32.gmra.mrb[0].mxu0 %v1396
        %v1620 = vpop.f32.mrb[0].mxu0
        %v1621 = vadd.f32 0.0, %v1620
        %v1622 = vpop.f32.mrb[0].mxu0
        %v1623 = vadd.f32 0.0, %v1622
        %1624 = vmatprep.mubr.f32.mxu0 0.0
        %1625 = vmatmul.mubr.f32.gmra.mrb[0].mxu0 %v1397
        %v1626 = vpop.f32.mrb[0].mxu0
        %v1627 = vadd.f32 0.0, %v1626
        %v1628 = vpop.f32.mrb[0].mxu0
        %v1629 = vadd.f32 0.0, %v1628
        %1630 = vmatprep.mubr.f32.mxu0 0.0
        %1631 = vmatmul.mubr.f32.gmra.mrb[0].mxu0 %v1398
        %v1632 = vpop.f32.mrb[0].mxu0
        %v1633 = vadd.f32 0.0, %v1632
        %v1634 = vpop.f32.mrb[0].mxu0
        %v1635 = vadd.f32 0.0, %v1634
        %1636 = vmatprep.mubr.f32.mxu0 0.0
        %1637 = vmatmul.mubr.f32.gmra.mrb[0].mxu0 %v1399
        %v1638 = vpop.f32.mrb[0].mxu0
        %v1639 = vadd.f32 0.0, %v1638
        %v1640 = vpop.f32.mrb[0].mxu0
        %v1641 = vadd.f32 0.0, %v1640
        %1642 = vdwg.mxu0
        %s1643 = scalar_lea.vmem [#allocation11], 512
        %v1644 = vld [vmem:[%s1643] sm:$0xff]
        %v1645 = vld [vmem:[%s1643 + $0x8] sm:$0xff]
        %v1646 = vld [vmem:[%s1643 + $0x10] sm:$0xff]
        %v1647 = vld [vmem:[%s1643 + $0x18] sm:$0xff]
        %v1648 = vld [vmem:[%s1643 + $0x20] sm:$0xff]
        %v1649 = vld [vmem:[%s1643 + $0x28] sm:$0xff]
        %v1650 = vld [vmem:[%s1643 + $0x30] sm:$0xff]
        %v1651 = vld [vmem:[%s1643 + $0x38] sm:$0xff]
        %v1652 = vld [vmem:[%s1643 + $0x40] sm:$0xff]
        %v1653 = vld [vmem:[%s1643 + $0x48] sm:$0xff]
        %v1654 = vld [vmem:[%s1643 + $0x50] sm:$0xff]
        %v1655 = vld [vmem:[%s1643 + $0x58] sm:$0xff]
        %v1656 = vld [vmem:[%s1643 + $0x60] sm:$0xff]
        %v1657 = vld [vmem:[%s1643 + $0x68] sm:$0xff]
        %v1658 = vld [vmem:[%s1643 + $0x70] sm:$0xff]
        %v1659 = vld [vmem:[%s1643 + $0x78] sm:$0xff]
        %v1660 = vld [vmem:[%s1643 + $0x80] sm:$0xff]
        %v1661 = vld [vmem:[%s1643 + $0x88] sm:$0xff]
        %v1662 = vld [vmem:[%s1643 + $0x90] sm:$0xff]
        %v1663 = vld [vmem:[%s1643 + $0x98] sm:$0xff]
        %v1664 = vld [vmem:[%s1643 + $0xa0] sm:$0xff]
        %v1665 = vld [vmem:[%s1643 + $0xa8] sm:$0xff]
        %v1666 = vld [vmem:[%s1643 + $0xb0] sm:$0xff]
        %v1667 = vld [vmem:[%s1643 + $0xb8] sm:$0xff]
        %v1668 = vld [vmem:[%s1643 + $0xc0] sm:$0xff]
        %v1669 = vld [vmem:[%s1643 + $0xc8] sm:$0xff]
        %v1670 = vld [vmem:[%s1643 + $0xd0] sm:$0xff]
        %v1671 = vld [vmem:[%s1643 + $0xd8] sm:$0xff]
        %v1672 = vld [vmem:[%s1643 + $0xe0] sm:$0xff]
        %v1673 = vld [vmem:[%s1643 + $0xe8] sm:$0xff]
        %v1674 = vld [vmem:[%s1643 + $0xf0] sm:$0xff]
        %v1675 = vld [vmem:[%s1643 + $0xf8] sm:$0xff]
        %1676 = vmatprep.subr.mxu0 %v1645
        %1677 = vmatpush1.msra.mxu0 %v1644
        %1678 = vmatprep.subr.mxu0 %v1647
        %1679 = vmatpush1.msra.mxu0 %v1646
        %1680 = vmatprep.subr.mxu0 %v1649
        %1681 = vmatpush1.msra.mxu0 %v1648
        %1682 = vmatprep.subr.mxu0 %v1651
        %1683 = vmatpush1.msra.mxu0 %v1650
        %1684 = vmatprep.subr.mxu0 %v1653
        %1685 = vmatpush1.msra.mxu0 %v1652
        %1686 = vmatprep.subr.mxu0 %v1655
        %1687 = vmatpush1.msra.mxu0 %v1654
        %1688 = vmatprep.subr.mxu0 %v1657
        %1689 = vmatpush1.msra.mxu0 %v1656
        %1690 = vmatprep.subr.mxu0 %v1659
        %1691 = vmatpush1.msra.mxu0 %v1658
        %1692 = vmatprep.subr.mxu0 %v1661
        %1693 = vmatpush1.msra.mxu0 %v1660
        %1694 = vmatprep.subr.mxu0 %v1663
        %1695 = vmatpush1.msra.mxu0 %v1662
        %1696 = vmatprep.subr.mxu0 %v1665
        %1697 = vmatpush1.msra.mxu0 %v1664
        %1698 = vmatprep.subr.mxu0 %v1667
        %1699 = vmatpush1.msra.mxu0 %v1666
        %1700 = vmatprep.subr.mxu0 %v1669
        %1701 = vmatpush1.msra.mxu0 %v1668
        %1702 = vmatprep.subr.mxu0 %v1671
        %1703 = vmatpush1.msra.mxu0 %v1670
        %1704 = vmatprep.subr.mxu0 %v1673
        %1705 = vmatpush1.msra.mxu0 %v1672
        %1706 = vmatprep.subr.mxu0 %v1675
        %1707 = vmatpush1.msra.mxu0 %v1674
        %1708 = vmatprep.subr.mxu0 0.0
        %1709 = vmatpush1.msra.mxu0 0.0
        %1710 = vmatprep.subr.mxu0 0.0
        %1711 = vmatpush1.msra.mxu0 0.0
        %1712 = vmatprep.subr.mxu0 0.0
        %1713 = vmatpush1.msra.mxu0 0.0
        %1714 = vmatprep.subr.mxu0 0.0
        %1715 = vmatpush1.msra.mxu0 0.0
        %1716 = vmatprep.subr.mxu0 0.0
        %1717 = vmatpush1.msra.mxu0 0.0
        %1718 = vmatprep.subr.mxu0 0.0
        %1719 = vmatpush1.msra.mxu0 0.0
        %1720 = vmatprep.subr.mxu0 0.0
        %1721 = vmatpush1.msra.mxu0 0.0
        %1722 = vmatprep.subr.mxu0 0.0
        %1723 = vmatpush1.msra.mxu0 0.0
        %1724 = vmatprep.subr.mxu0 0.0
        %1725 = vmatpush1.msra.mxu0 0.0
        %1726 = vmatprep.subr.mxu0 0.0
        %1727 = vmatpush1.msra.mxu0 0.0
        %1728 = vmatprep.subr.mxu0 0.0
        %1729 = vmatpush1.msra.mxu0 0.0
        %1730 = vmatprep.subr.mxu0 0.0
        %1731 = vmatpush1.msra.mxu0 0.0
        %1732 = vmatprep.subr.mxu0 0.0
        %1733 = vmatpush1.msra.mxu0 0.0
        %1734 = vmatprep.subr.mxu0 0.0
        %1735 = vmatpush1.msra.mxu0 0.0
        %1736 = vmatprep.subr.mxu0 0.0
        %1737 = vmatpush1.msra.mxu0 0.0
        %1738 = vmatprep.subr.mxu0 0.0
        %1739 = vmatpush1.msra.mxu0 0.0
        %1740 = vmatprep.mubr.f32.mxu0 0.0
        %1741 = vmatmul.mubr.f32.gmra.mrb[0].mxu0 %v1396
        %v1742 = vpop.f32.mrb[0].mxu0
        %v1743 = vadd.f32 0.0, %v1742
        %v1744 = vpop.f32.mrb[0].mxu0
        %v1745 = vadd.f32 0.0, %v1744
        %1746 = vmatprep.mubr.f32.mxu0 0.0
        %1747 = vmatmul.mubr.f32.gmra.mrb[0].mxu0 %v1397
        %v1748 = vpop.f32.mrb[0].mxu0
        %v1749 = vadd.f32 0.0, %v1748
        %v1750 = vpop.f32.mrb[0].mxu0
        %v1751 = vadd.f32 0.0, %v1750
        %1752 = vmatprep.mubr.f32.mxu0 0.0
        %1753 = vmatmul.mubr.f32.gmra.mrb[0].mxu0 %v1398
        %v1754 = vpop.f32.mrb[0].mxu0
        %v1755 = vadd.f32 0.0, %v1754
        %v1756 = vpop.f32.mrb[0].mxu0
        %v1757 = vadd.f32 0.0, %v1756
        %1758 = vmatprep.mubr.f32.mxu0 0.0
        %1759 = vmatmul.mubr.f32.gmra.mrb[0].mxu0 %v1399
        %v1760 = vpop.f32.mrb[0].mxu0
        %v1761 = vadd.f32 0.0, %v1760
        %v1762 = vpop.f32.mrb[0].mxu0
        %v1763 = vadd.f32 0.0, %v1762
        %1764 = vdwg.mxu0
        %1765 = vmatprep.subr.mxu0 %v1501
        %1766 = vmatpush1.msra.mxu0 %v1499
        %1767 = vmatprep.subr.mxu0 %v1507
        %1768 = vmatpush1.msra.mxu0 %v1505
        %1769 = vmatprep.subr.mxu0 %v1513
        %1770 = vmatpush1.msra.mxu0 %v1511
        %1771 = vmatprep.subr.mxu0 %v1519
        %1772 = vmatpush1.msra.mxu0 %v1517
        %1773 = vmatprep.subr.mxu0 0.0
        %1774 = vmatpush1.msra.mxu0 0.0
        %1775 = vmatprep.subr.mxu0 0.0
        %1776 = vmatpush1.msra.mxu0 0.0
        %1777 = vmatprep.subr.mxu0 0.0
        %1778 = vmatpush1.msra.mxu0 0.0
        %1779 = vmatprep.subr.mxu0 0.0
        %1780 = vmatpush1.msra.mxu0 0.0
        %1781 = vmatprep.subr.mxu0 0.0
        %1782 = vmatpush1.msra.mxu0 0.0
        %1783 = vmatprep.subr.mxu0 0.0
        %1784 = vmatpush1.msra.mxu0 0.0
        %1785 = vmatprep.subr.mxu0 0.0
        %1786 = vmatpush1.msra.mxu0 0.0
        %1787 = vmatprep.subr.mxu0 0.0
        %1788 = vmatpush1.msra.mxu0 0.0
        %1789 = vmatprep.subr.mxu0 0.0
        %1790 = vmatpush1.msra.mxu0 0.0
        %1791 = vmatprep.subr.mxu0 0.0
        %1792 = vmatpush1.msra.mxu0 0.0
        %1793 = vmatprep.subr.mxu0 0.0
        %1794 = vmatpush1.msra.mxu0 0.0
        %1795 = vmatprep.subr.mxu0 0.0
        %1796 = vmatpush1.msra.mxu0 0.0
        %1797 = vmatprep.subr.mxu0 0.0
        %1798 = vmatpush1.msra.mxu0 0.0
        %1799 = vmatprep.subr.mxu0 0.0
        %1800 = vmatpush1.msra.mxu0 0.0
        %1801 = vmatprep.subr.mxu0 0.0
        %1802 = vmatpush1.msra.mxu0 0.0
        %1803 = vmatprep.subr.mxu0 0.0
        %1804 = vmatpush1.msra.mxu0 0.0
        %1805 = vmatprep.subr.mxu0 0.0
        %1806 = vmatpush1.msra.mxu0 0.0
        %1807 = vmatprep.subr.mxu0 0.0
        %1808 = vmatpush1.msra.mxu0 0.0
        %1809 = vmatprep.subr.mxu0 0.0
        %1810 = vmatpush1.msra.mxu0 0.0
        %1811 = vmatprep.subr.mxu0 0.0
        %1812 = vmatpush1.msra.mxu0 0.0
        %1813 = vmatprep.subr.mxu0 0.0
        %1814 = vmatpush1.msra.mxu0 0.0
        %1815 = vmatprep.subr.mxu0 0.0
        %1816 = vmatpush1.msra.mxu0 0.0
        %1817 = vmatprep.subr.mxu0 0.0
        %1818 = vmatpush1.msra.mxu0 0.0
        %1819 = vmatprep.subr.mxu0 0.0
        %1820 = vmatpush1.msra.mxu0 0.0
        %1821 = vmatprep.subr.mxu0 0.0
        %1822 = vmatpush1.msra.mxu0 0.0
        %1823 = vmatprep.subr.mxu0 0.0
        %1824 = vmatpush1.msra.mxu0 0.0
        %1825 = vmatprep.subr.mxu0 0.0
        %1826 = vmatpush1.msra.mxu0 0.0
        %1827 = vmatprep.subr.mxu0 0.0
        %1828 = vmatpush1.msra.mxu0 0.0
        %1829 = vmatprep.mubr.f32.mxu0 0.0
        %1830 = vmatmul.mubr.f32.gmra.mrb[0].mxu0 %v1188
        %v1831 = vpop.f32.mrb[0].mxu0
        %v1832 = vadd.f32 %v1621, %v1831
        %v1833 = vpop.f32.mrb[0].mxu0
        %v1834 = vadd.f32 %v1623, %v1833
        %1835 = vmatprep.mubr.f32.mxu0 0.0
        %1836 = vmatmul.mubr.f32.gmra.mrb[0].mxu0 %v1191
        %v1837 = vpop.f32.mrb[0].mxu0
        %v1838 = vadd.f32 %v1627, %v1837
        %v1839 = vpop.f32.mrb[0].mxu0
        %v1840 = vadd.f32 %v1629, %v1839
        %1841 = vmatprep.mubr.f32.mxu0 0.0
        %1842 = vmatmul.mubr.f32.gmra.mrb[0].mxu0 %v1194
        %v1843 = vpop.f32.mrb[0].mxu0
        %v1844 = vadd.f32 %v1633, %v1843
        %v1845 = vpop.f32.mrb[0].mxu0
        %v1846 = vadd.f32 %v1635, %v1845
        %1847 = vmatprep.mubr.f32.mxu0 0.0
        %1848 = vmatmul.mubr.f32.gmra.mrb[0].mxu0 %v1197
        %v1849 = vpop.f32.mrb[0].mxu0
        %v1850 = vadd.f32 %v1639, %v1849
        %v1851 = vpop.f32.mrb[0].mxu0
        %v1852 = vadd.f32 %v1641, %v1851
        %1853 = vdwg.mxu0
        %1854 = vmatprep.subr.mxu0 %v1745
        %1855 = vmatpush1.msra.mxu0 %v1743
        %1856 = vmatprep.subr.mxu0 %v1751
        %1857 = vmatpush1.msra.mxu0 %v1749
        %1858 = vmatprep.subr.mxu0 %v1757
        %1859 = vmatpush1.msra.mxu0 %v1755
        %1860 = vmatprep.subr.mxu0 %v1763
        %1861 = vmatpush1.msra.mxu0 %v1761
        %1862 = vmatprep.subr.mxu0 0.0
        %1863 = vmatpush1.msra.mxu0 0.0
        %1864 = vmatprep.subr.mxu0 0.0
        %1865 = vmatpush1.msra.mxu0 0.0
        %1866 = vmatprep.subr.mxu0 0.0
        %1867 = vmatpush1.msra.mxu0 0.0
        %1868 = vmatprep.subr.mxu0 0.0
        %1869 = vmatpush1.msra.mxu0 0.0
        %1870 = vmatprep.subr.mxu0 0.0
        %1871 = vmatpush1.msra.mxu0 0.0
        %1872 = vmatprep.subr.mxu0 0.0
        %1873 = vmatpush1.msra.mxu0 0.0
        %1874 = vmatprep.subr.mxu0 0.0
        %1875 = vmatpush1.msra.mxu0 0.0
        %1876 = vmatprep.subr.mxu0 0.0
        %1877 = vmatpush1.msra.mxu0 0.0
        %1878 = vmatprep.subr.mxu0 0.0
        %1879 = vmatpush1.msra.mxu0 0.0
        %1880 = vmatprep.subr.mxu0 0.0
        %1881 = vmatpush1.msra.mxu0 0.0
        %1882 = vmatprep.subr.mxu0 0.0
        %1883 = vmatpush1.msra.mxu0 0.0
        %1884 = vmatprep.subr.mxu0 0.0
        %1885 = vmatpush1.msra.mxu0 0.0
        %1886 = vmatprep.subr.mxu0 0.0
        %1887 = vmatpush1.msra.mxu0 0.0
        %1888 = vmatprep.subr.mxu0 0.0
        %1889 = vmatpush1.msra.mxu0 0.0
        %1890 = vmatprep.subr.mxu0 0.0
        %1891 = vmatpush1.msra.mxu0 0.0
        %1892 = vmatprep.subr.mxu0 0.0
        %1893 = vmatpush1.msra.mxu0 0.0
        %1894 = vmatprep.subr.mxu0 0.0
        %1895 = vmatpush1.msra.mxu0 0.0
        %1896 = vmatprep.subr.mxu0 0.0
        %1897 = vmatpush1.msra.mxu0 0.0
        %1898 = vmatprep.subr.mxu0 0.0
        %1899 = vmatpush1.msra.mxu0 0.0
        %1900 = vmatprep.subr.mxu0 0.0
        %1901 = vmatpush1.msra.mxu0 0.0
        %1902 = vmatprep.subr.mxu0 0.0
        %1903 = vmatpush1.msra.mxu0 0.0
        %1904 = vmatprep.subr.mxu0 0.0
        %1905 = vmatpush1.msra.mxu0 0.0
        %1906 = vmatprep.subr.mxu0 0.0
        %1907 = vmatpush1.msra.mxu0 0.0
        %1908 = vmatprep.subr.mxu0 0.0
        %1909 = vmatpush1.msra.mxu0 0.0
        %1910 = vmatprep.subr.mxu0 0.0
        %1911 = vmatpush1.msra.mxu0 0.0
        %1912 = vmatprep.subr.mxu0 0.0
        %1913 = vmatpush1.msra.mxu0 0.0
        %1914 = vmatprep.subr.mxu0 0.0
        %1915 = vmatpush1.msra.mxu0 0.0
        %1916 = vmatprep.subr.mxu0 0.0
        %1917 = vmatpush1.msra.mxu0 0.0
        %1918 = vmatprep.mubr.f32.mxu0 0.0
        %1919 = vmatmul.mubr.f32.gmra.mrb[0].mxu0 %v1285
        %v1920 = vpop.f32.mrb[0].mxu0
        %v1921 = vadd.f32 0.0, %v1920
        %v1922 = vpop.f32.mrb[0].mxu0
        %v1923 = vadd.f32 0.0, %v1922
        %1924 = vmatprep.mubr.f32.mxu0 0.0
        %1925 = vmatmul.mubr.f32.gmra.mrb[0].mxu0 %v1288
        %v1926 = vpop.f32.mrb[0].mxu0
        %v1927 = vadd.f32 0.0, %v1926
        %v1928 = vpop.f32.mrb[0].mxu0
        %v1929 = vadd.f32 0.0, %v1928
        %1930 = vmatprep.mubr.f32.mxu0 0.0
        %1931 = vmatmul.mubr.f32.gmra.mrb[0].mxu0 %v1291
        %v1932 = vpop.f32.mrb[0].mxu0
        %v1933 = vadd.f32 0.0, %v1932
        %v1934 = vpop.f32.mrb[0].mxu0
        %v1935 = vadd.f32 0.0, %v1934
        %1936 = vmatprep.mubr.f32.mxu0 0.0
        %1937 = vmatmul.mubr.f32.gmra.mrb[0].mxu0 %v1294
        %v1938 = vpop.f32.mrb[0].mxu0
        %v1939 = vadd.f32 0.0, %v1938
        %v1940 = vpop.f32.mrb[0].mxu0
        %v1941 = vadd.f32 0.0, %v1940
        %1942 = vdwg.mxu0
        %v1943 = vadd.f32 %v1832, %v1921
        %v1944 = vadd.f32 %v1834, %v1923
        %v1945 = vadd.f32 %v1838, %v1927
        %v1946 = vadd.f32 %v1840, %v1929
        %v1947 = vadd.f32 %v1844, %v1933
        %v1948 = vadd.f32 %v1846, %v1935
        %v1949 = vadd.f32 %v1850, %v1939
        %v1950 = vadd.f32 %v1852, %v1941
        %v1951 = vld [vmem:[%s9] sm:$0x3]
        %v1953 = vlaneseq
        %v1954 = vshrl.u32 %v1953, 7
        %v1955 = vsub.s32 0, %v1954
        %v1956 = vrot.slane %v1951, %v1955
        %v1957 = vlaneseq
        %v1958 = vshrl.u32 %v1957, 7
        %v1959 = vsub.s32 1, %v1958
        %v1960 = vrot.slane %v1951, %v1959
        %v1963 = vadd.f32 %v1943, %v1956
        %v1964 = vadd.f32 %v1944, %v1960
        %v1965 = vadd.f32 %v1945, %v1956
        %v1966 = vadd.f32 %v1946, %v1960
        %v1967 = vadd.f32 %v1947, %v1956
        %v1968 = vadd.f32 %v1948, %v1960
        %v1969 = vadd.f32 %v1949, %v1956
        %v1970 = vadd.f32 %v1950, %v1960
        %v1971 = vmax.f32 %v1963, 0.0
        %v1972 = vmax.f32 %v1964, 0.0
        %v1973 = vmax.f32 %v1965, 0.0
        %v1974 = vmax.f32 %v1966, 0.0
        %v1975 = vmax.f32 %v1967, 0.0
        %v1976 = vmax.f32 %v1968, 0.0
        %v1977 = vmax.f32 %v1969, 0.0
        %v1978 = vmax.f32 %v1970, 0.0
        %1979 = vst [vmem:[%s465] sm:$0xff] %v1971
        %1980 = vst [vmem:[%s465 + $0x8] sm:$0xff] %v1972
        %1981 = vst [vmem:[%s465 + $0x10] sm:$0xff] %v1973
        %1982 = vst [vmem:[%s465 + $0x18] sm:$0xff] %v1974
        %1983 = vst [vmem:[%s465 + $0x20] sm:$0xff] %v1975
        %1984 = vst [vmem:[%s465 + $0x28] sm:$0xff] %v1976
        %1985 = vst [vmem:[%s465 + $0x30] sm:$0xff] %v1977
        %1986 = vst [vmem:[%s465 + $0x38] sm:$0xff] %v1978
        %s1987 = sand.u32 %s258, 1
        %s1988 = scalar_lea.sflag [#allocation4], %s1987
        %s1989 = sand.u32 %s258, 1
        %s1990 = smul.addr %s1989, 64
        %s1991 = scalar_lea.vmem [#allocation13], %s1990
        // Predicated region
        $region85: #{tpu_custom_call.1} parent=59 // pred_check
          %p1992 = pneg %p268
        $region86: #{tpu_custom_call.1} parent=59 // pred_check_branch
          %1994 = sbr.rel (%p1992) target = $region88
        $region87: #{tpu_custom_call.1} parent=59 // pred_region
          %s1996 = ssub.s32 1024, 1024
          %1997 = vsyncadd %s1988, %s1996
          %s1998 = smul.addr %s30, 8
          %s1999 = smul.addr %s1998, 128
          %s2000 = scalar_lea.hbm %s10, %s1999
          %s2001 = sshll.u32 %s1991, 4
          %s2002 = int_to_ptr.vmem [resolvable:$true] %s2001
          %2007 = dma.vmem_to_hbm [thread:$0]  %s2002, 1024, %s2000, %s1988, 256, 256, 16
        $region88: #{tpu_custom_call.1} parent=59 // pred_fallthru
          _
      $region60: #{tpu_custom_call.1} parent=5 // pred_fallthru
        _
      %p2008 = scmp.le.s32.totalorder 2, %s25
      // Predicated region
      $region89: #{tpu_custom_call.1} parent=5 // pred_check
        %p2009 = pneg %p2008
      $region90: #{tpu_custom_call.1} parent=5 // pred_check_branch
        %2011 = sbr.rel (%p2009) target = $region92
      $region91: #{tpu_custom_call.1} parent=5 // pred_region
        %s2012 = ssub.s32 %s25, 2
        // Predicated region
        $region93: #{tpu_custom_call.1} parent=91 // pred_check
          %p2013 = pneg %p274
        $region94: #{tpu_custom_call.1} parent=91 // pred_check_branch
          %2015 = sbr.rel (%p2013) target = $region96
        $region95: #{tpu_custom_call.1} parent=91 // pred_region
          %s2016 = sand.u32 %s259, 1
          %s2017 = scalar_lea.sflag [#allocation4], %s2016
          %s2018 = sand.u32 %s259, 1
          %s2019 = smul.addr %s2018, 64
          %s2020 = scalar_lea.vmem [#allocation13], %s2019
          %2021 = dma.done %s2017, 1024
        $region96: #{tpu_custom_call.1} parent=91 // pred_fallthru
          _
      $region92: #{tpu_custom_call.1} parent=5 // pred_fallthru
        _
    $region6: #{tpu_custom_call.1} parent=1 // loop_footer
      %s29 = sadd.s32 1, %s25
    $region7: #{tpu_custom_call.1} parent=1 // loop_footer_branch
      %24 = sbr.rel target = $region3
    $region8: #{tpu_custom_call.1} parent=1 // loop_exit
      _
    %2022 = vsyncpa [#allocation3], 1
    %s2023 = scalar_lea.sflag [#allocation3], 1
    %2024 = vsyncpa %s2023, 1
    %2025 = vsyncpa [#allocation6], 1
    %2026 = vsyncpa [#allocation9], 1
    %2027 = vsyncpa [#allocation12], 1
    %2028 = vsyncpa [#allocation4], 1
    %s2029 = scalar_lea.sflag [#allocation4], 1
    %2030 = vsyncpa %s2029, 1

</llo_original>
